<compile_context>
chip_gen: v7x
topology: tpu7x:2x2x1
jax: 0.10.0
libtpu: 0.0.40
codegen_flags: <defaults>
</compile_context>

<pallas_src>
import jax
import jax.numpy as jnp
from jax import lax
from jax.experimental import pallas as pl
from jax.experimental.pallas import tpu as pltpu

CHUNK = 256  # lane sub-chunk processed per inner-loop iteration (multiple of 128)


def mlp_kernel(x_ref, w1_ref, b1_ref, w2_ref, b2_ref, w3_ref, b3_ref, o_ref):
    # x_ref : (1, TM)   lane-dense batch tile
    # w1/b1 : (64, 1)   b2 : (64, 1)   w2 : (64, 64)   w3 : (64, 1) column
    # b3    : (1, 1)    scalar in SMEM
    # o_ref : (1, TM)   lane-dense output tile
    w1 = w1_ref[...]                                  # (64, 1) f32
    b1 = b1_ref[...]                                  # (64, 1) f32
    w2 = w2_ref[...].astype(jnp.bfloat16)             # (64, 64) bf16 for native MXU
    b2 = b2_ref[...]                                  # (64, 1) f32
    w3 = w3_ref[...]                                  # (64, 1) f32 (VPU layer-3)
    b3 = b3_ref[0, 0]                                 # scalar f32 from SMEM

    n_chunks = x_ref.shape[1] // CHUNK                # static

    def body(j, carry):
        off = pl.multiple_of(j * CHUNK, 128)          # aligned dynamic lane offset
        x = x_ref[:, pl.ds(off, CHUNK)]               # (1, C)
        # NOTE: a stride-0 sublane-broadcast load (pl.ds(0, 64, stride=0)) could
        # move this replication into the vld slot; kept as implicit broadcast
        # for robustness across generations.

        # Layer 1: K=1 contraction -> VPU broadcast FMA + ReLU (no MXU).
        h1 = jnp.maximum(w1 * x + b1, 0.0)            # (64, C) f32

        # Layer 2: the only MXU matmul; bf16 inputs, f32 accumulation.
        h2 = jnp.dot(w2, h1.astype(jnp.bfloat16),
                     preferred_element_type=jnp.float32)   # (64, C) f32
        h2 = jnp.maximum(h2 + b2, 0.0)

        # Layer 3 on VPU/XLU: broadcast multiply + cross-sublane reduction.
        y = jnp.sum(w3 * h2, axis=0, keepdims=True) + b3   # (1, C) f32

        o_ref[:, pl.ds(off, CHUNK)] = y.astype(o_ref.dtype)
        return carry

    lax.fori_loop(0, n_chunks, body, 0, unroll=True)


def linear_regression_forward(x, params, *, tm=1024):
    """x: (N, 1) float32.  params in PyTorch (out, in) layout, biases (out, 1)."""
    N = x.shape[0]
    assert tm % CHUNK == 0
    n_tiles = pl.cdiv(N, tm)
    Np = n_tiles * tm

    # Batch on the lane (last) axis; pad the tail tile with zeros.
    xt = x.reshape(1, N)
    if Np != N:
        xt = jnp.pad(xt, ((0, 0), (0, Np - N)))

    w1, b1 = params["w1"], params["b1"]
    w2, b2 = params["w2"], params["b2"]
    w3, b3 = params["w3"], params["b3"]
    w3c = w3.reshape(64, 1)   # column layout so layer 3 is a sublane reduce in-kernel

    full = lambda i: (0, 0)   # weights/biases stay resident (no per-step re-DMA)

    yt = pl.pallas_call(
        mlp_kernel,
        out_shape=jax.ShapeDtypeStruct((1, Np), jnp.float32),
        grid_spec=pltpu.PrefetchScalarGridSpec(
            num_scalar_prefetch=0,
            grid=(n_tiles,),
            in_specs=[
                pl.BlockSpec((1, tm), lambda i: (0, i)),            # x (lane-dense)
                pl.BlockSpec(w1.shape, full),                       # (64, 1)
                pl.BlockSpec(b1.shape, full),                       # (64, 1)
                pl.BlockSpec(w2.shape, full),                       # (64, 64)
                pl.BlockSpec(b2.shape, full),                       # (64, 1)
                pl.BlockSpec(w3c.shape, full),                      # (64, 1)
                pl.BlockSpec(memory_space=pltpu.MemorySpace.SMEM),  # b3 scalar
            ],
            out_specs=pl.BlockSpec((1, tm), lambda i: (0, i)),
        ),
        compiler_params=pltpu.CompilerParams(
            dimension_semantics=("parallel",),      # shard batch tiles across TCs (v7x)
            vmem_limit_bytes=32 * 1024 * 1024,      # harmless guardrail (<1 MiB used)
        ),
    )(xt, w1, b1, w2, b2, w3c, b3)

    # Un-transpose / un-pad outside the kernel.
    return yt[:, :N].reshape(N, 1)


def init_params(key):
    """Deterministic init matching PyTorch Linear default (U(-1/sqrt(fan_in), +)),
    stored in PyTorch (out, in) layout; biases as (out, 1) columns."""
    ks = jax.random.split(key, 6)

    def linear(kw, kb, fan_in, fan_out):
        bound = 1.0 / jnp.sqrt(jnp.float32(fan_in))
        w = jax.random.uniform(kw, (fan_out, fan_in), jnp.float32, -bound, bound)
        b = jax.random.uniform(kb, (fan_out, 1), jnp.float32, -bound, bound)
        return w, b

    w1, b1 = linear(ks[0], ks[1], 1, 64)
    w2, b2 = linear(ks[2], ks[3], 64, 64)
    w3, b3 = linear(ks[4], ks[5], 64, 1)
    return {"w1": w1, "b1": b1, "w2": w2, "b2": b2, "w3": w3, "b3": b3}


def reference_forward(x, p, *, matmul_dtype=jnp.float32):
    """Pure-JAX reference in batch-major (N, feature) layout.  With
    matmul_dtype=bf16 it mirrors the kernel's dtype handling exactly."""
    h1 = jnp.maximum(x * p["w1"].reshape(1, 64) + p["b1"].reshape(1, 64), 0.0)
    h2 = jnp.dot(h1.astype(matmul_dtype), p["w2"].T.astype(matmul_dtype),
                 preferred_element_type=jnp.float32,
                 precision=lax.Precision.HIGHEST)
    h2 = jnp.maximum(h2 + p["b2"].reshape(1, 64), 0.0)
    y = jnp.sum(h2 * p["w3"].reshape(1, 64), axis=1, keepdims=True)
    return y + p["b3"].reshape(1, 1)


if __name__ == "__main__":
    key = jax.random.PRNGKey(0)
    kparam, _ = jax.random.split(key)
    params = init_params(kparam)

    # N=2048 -> an even grid of 2 parallel tiles of tm=1024 (keeps both v7x
    # TensorCores busy); matches the module's (N, 1) input shape.
    N = 2048
    x = jnp.linspace(-10.0, 10.0, N, dtype=jnp.float32).reshape(N, 1)

    out = jax.block_until_ready(linear_regression_forward(x, params, tm=1024))
    assert out.shape == (N, 1)

    # Tight check vs a reference that mirrors the kernel's bf16-matmul math.
    ref_bf16 = reference_forward(x, params, matmul_dtype=jnp.bfloat16)
    assert jnp.allclose(out, ref_bf16, atol=5e-3, rtol=5e-3), "mismatch vs bf16 reference"

    # Loose check vs the pure-f32 module semantics (bf16 MXU inputs => ~1e-2 rel).
    ref_f32 = reference_forward(x, params, matmul_dtype=jnp.float32)
    assert jnp.allclose(out, ref_f32, atol=1e-1, rtol=2e-2), "mismatch vs f32 reference"

    print("KERNEL_OK")
</pallas_src>

<mosaic_0001>
module attributes {stable_mosaic.version = 11 : i64} {
  func.func @mlp_kernel(%arg0: i32, %arg1: memref<1x1024xf32, #tpu.memory_space<vmem>>, %arg2: memref<64x1xf32, #tpu.memory_space<vmem>>, %arg3: memref<64x1xf32, #tpu.memory_space<vmem>>, %arg4: memref<64x64xf32, #tpu.memory_space<vmem>>, %arg5: memref<64x1xf32, #tpu.memory_space<vmem>>, %arg6: memref<64x1xf32, #tpu.memory_space<vmem>>, %arg7: memref<1x1xf32, #tpu.memory_space<smem>>, %arg8: memref<1x1024xf32, #tpu.memory_space<vmem>>) attributes {dimension_semantics = [#tpu.dimension_semantics<parallel>], iteration_bounds = array<i64: 2>, scalar_prefetch = 0 : i64, scratch_operands = 0 : i64, tpu.core_type = #tpu.core_type<tc>, window_params = [{transform_indices = @transform_0, window_bounds = array<i64: 1, 1024>}, {pipeline_mode = #tpu.pipeline_mode<synchronous>, transform_indices = @transform_1, window_bounds = array<i64: 64, 1>}, {pipeline_mode = #tpu.pipeline_mode<synchronous>, transform_indices = @transform_2, window_bounds = array<i64: 64, 1>}, {pipeline_mode = #tpu.pipeline_mode<synchronous>, transform_indices = @transform_3, window_bounds = array<i64: 64, 64>}, {pipeline_mode = #tpu.pipeline_mode<synchronous>, transform_indices = @transform_4, window_bounds = array<i64: 64, 1>}, {pipeline_mode = #tpu.pipeline_mode<synchronous>, transform_indices = @transform_5, window_bounds = array<i64: 64, 1>}, {transform_indices = @transform_6, window_bounds = array<i64: 1, 1>}, {transform_indices = @transform_7, window_bounds = array<i64: 1, 1024>}]} {
    %c0 = arith.constant 0 : index
    %c0_0 = arith.constant 0 : index
    %0 = vector.load %arg2[%c0, %c0_0] : memref<64x1xf32, #tpu.memory_space<vmem>>, vector<64x1xf32>
    %c0_1 = arith.constant 0 : index
    %c0_2 = arith.constant 0 : index
    %1 = vector.load %arg3[%c0_1, %c0_2] : memref<64x1xf32, #tpu.memory_space<vmem>>, vector<64x1xf32>
    %c0_3 = arith.constant 0 : index
    %c0_4 = arith.constant 0 : index
    %2 = vector.load %arg4[%c0_3, %c0_4] : memref<64x64xf32, #tpu.memory_space<vmem>>, vector<64x64xf32>
    %3 = arith.truncf %2 : vector<64x64xf32> to vector<64x64xbf16>
    %c0_5 = arith.constant 0 : index
    %c0_6 = arith.constant 0 : index
    %4 = vector.load %arg5[%c0_5, %c0_6] : memref<64x1xf32, #tpu.memory_space<vmem>>, vector<64x1xf32>
    %c0_7 = arith.constant 0 : index
    %c0_8 = arith.constant 0 : index
    %5 = vector.load %arg6[%c0_7, %c0_8] : memref<64x1xf32, #tpu.memory_space<vmem>>, vector<64x1xf32>
    %c0_9 = arith.constant 0 : index
    %c0_10 = arith.constant 0 : index
    %6 = memref.load %arg7[%c0_9, %c0_10] : memref<1x1xf32, #tpu.memory_space<smem>>
    %c0_i32 = arith.constant 0 : i32
    %c256_i32 = arith.constant 256 : i32
    %7 = arith.muli %c0_i32, %c256_i32 : i32
    %8 = tpu.assume_multiple %7, 128 : i32
    %c0_11 = arith.constant 0 : index
    %9 = arith.index_cast %8 : i32 to index
    %10 = vector.load %arg1[%c0_11, %9] : memref<1x1024xf32, #tpu.memory_space<vmem>>, vector<1x256xf32>
    %11 = vector.broadcast %0 : vector<64x1xf32> to vector<64x256xf32>
    %12 = vector.broadcast %10 : vector<1x256xf32> to vector<64x256xf32>
    %13 = arith.mulf %11, %12 : vector<64x256xf32>
    %14 = vector.broadcast %1 : vector<64x1xf32> to vector<64x256xf32>
    %15 = arith.addf %13, %14 : vector<64x256xf32>
    %cst = arith.constant 0.000000e+00 : f32
    %16 = vector.broadcast %cst : f32 to vector<64x256xf32>
    %17 = arith.maximumf %15, %16 : vector<64x256xf32>
    %18 = arith.truncf %17 : vector<64x256xf32> to vector<64x256xbf16>
    %cst_12 = arith.constant dense<0.000000e+00> : vector<64x256xf32>
    %19 = tpu.matmul %3, %18, %cst_12 {dimension_numbers = #tpu.dot_dimension_numbers<[1], [0], [0], [1], [0, 0, 1, 1], [], []>} : vector<64x64xbf16>, vector<64x256xbf16>, vector<64x256xf32> -> vector<64x256xf32>
    %20 = vector.broadcast %4 : vector<64x1xf32> to vector<64x256xf32>
    %21 = arith.addf %19, %20 : vector<64x256xf32>
    %cst_13 = arith.constant 0.000000e+00 : f32
    %22 = vector.broadcast %cst_13 : f32 to vector<64x256xf32>
    %23 = arith.maximumf %21, %22 : vector<64x256xf32>
    %24 = vector.broadcast %5 : vector<64x1xf32> to vector<64x256xf32>
    %25 = arith.mulf %24, %23 : vector<64x256xf32>
    %cst_14 = arith.constant dense<0.000000e+00> : vector<256xf32>
    %26 = vector.multi_reduction <add>, %25, %cst_14 [0] : vector<64x256xf32> to vector<256xf32>
    %27 = vector.shape_cast %26 : vector<256xf32> to vector<1x256xf32>
    %28 = vector.broadcast %6 : f32 to vector<1x256xf32>
    %29 = arith.addf %27, %28 : vector<1x256xf32>
    %c0_15 = arith.constant 0 : index
    %30 = arith.index_cast %8 : i32 to index
    %31 = vector.load %arg8[%c0_15, %30] : memref<1x1024xf32, #tpu.memory_space<vmem>>, vector<1x256xf32>
    tpu.vector_store %arg8[%c0_15, %30], %29 {strides = array<i32>} : memref<1x1024xf32, #tpu.memory_space<vmem>>, vector<1x256xf32>,
    %c1_i32 = arith.constant 1 : i32
    %c256_i32_16 = arith.constant 256 : i32
    %32 = arith.muli %c1_i32, %c256_i32_16 : i32
    %33 = tpu.assume_multiple %32, 128 : i32
    %c0_17 = arith.constant 0 : index
    %34 = arith.index_cast %33 : i32 to index
    %35 = vector.load %arg1[%c0_17, %34] : memref<1x1024xf32, #tpu.memory_space<vmem>>, vector<1x256xf32>
    %36 = vector.broadcast %0 : vector<64x1xf32> to vector<64x256xf32>
    %37 = vector.broadcast %35 : vector<1x256xf32> to vector<64x256xf32>
    %38 = arith.mulf %36, %37 : vector<64x256xf32>
    %39 = vector.broadcast %1 : vector<64x1xf32> to vector<64x256xf32>
    %40 = arith.addf %38, %39 : vector<64x256xf32>
    %cst_18 = arith.constant 0.000000e+00 : f32
    %41 = vector.broadcast %cst_18 : f32 to vector<64x256xf32>
    %42 = arith.maximumf %40, %41 : vector<64x256xf32>
    %43 = arith.truncf %42 : vector<64x256xf32> to vector<64x256xbf16>
    %cst_19 = arith.constant dense<0.000000e+00> : vector<64x256xf32>
    %44 = tpu.matmul %3, %43, %cst_19 {dimension_numbers = #tpu.dot_dimension_numbers<[1], [0], [0], [1], [0, 0, 1, 1], [], []>} : vector<64x64xbf16>, vector<64x256xbf16>, vector<64x256xf32> -> vector<64x256xf32>
    %45 = vector.broadcast %4 : vector<64x1xf32> to vector<64x256xf32>
    %46 = arith.addf %44, %45 : vector<64x256xf32>
    %cst_20 = arith.constant 0.000000e+00 : f32
    %47 = vector.broadcast %cst_20 : f32 to vector<64x256xf32>
    %48 = arith.maximumf %46, %47 : vector<64x256xf32>
    %49 = vector.broadcast %5 : vector<64x1xf32> to vector<64x256xf32>
    %50 = arith.mulf %49, %48 : vector<64x256xf32>
    %cst_21 = arith.constant dense<0.000000e+00> : vector<256xf32>
    %51 = vector.multi_reduction <add>, %50, %cst_21 [0] : vector<64x256xf32> to vector<256xf32>
    %52 = vector.shape_cast %51 : vector<256xf32> to vector<1x256xf32>
    %53 = vector.broadcast %6 : f32 to vector<1x256xf32>
    %54 = arith.addf %52, %53 : vector<1x256xf32>
    %c0_22 = arith.constant 0 : index
    %55 = arith.index_cast %33 : i32 to index
    %56 = vector.load %arg8[%c0_22, %55] : memref<1x1024xf32, #tpu.memory_space<vmem>>, vector<1x256xf32>
    tpu.vector_store %arg8[%c0_22, %55], %54 {strides = array<i32>} : memref<1x1024xf32, #tpu.memory_space<vmem>>, vector<1x256xf32>,
    %c2_i32 = arith.constant 2 : i32
    %c256_i32_23 = arith.constant 256 : i32
    %57 = arith.muli %c2_i32, %c256_i32_23 : i32
    %58 = tpu.assume_multiple %57, 128 : i32
    %c0_24 = arith.constant 0 : index
    %59 = arith.index_cast %58 : i32 to index
    %60 = vector.load %arg1[%c0_24, %59] : memref<1x1024xf32, #tpu.memory_space<vmem>>, vector<1x256xf32>
    %61 = vector.broadcast %0 : vector<64x1xf32> to vector<64x256xf32>
    %62 = vector.broadcast %60 : vector<1x256xf32> to vector<64x256xf32>
    %63 = arith.mulf %61, %62 : vector<64x256xf32>
    %64 = vector.broadcast %1 : vector<64x1xf32> to vector<64x256xf32>
    %65 = arith.addf %63, %64 : vector<64x256xf32>
    %cst_25 = arith.constant 0.000000e+00 : f32
    %66 = vector.broadcast %cst_25 : f32 to vector<64x256xf32>
    %67 = arith.maximumf %65, %66 : vector<64x256xf32>
    %68 = arith.truncf %67 : vector<64x256xf32> to vector<64x256xbf16>
    %cst_26 = arith.constant dense<0.000000e+00> : vector<64x256xf32>
    %69 = tpu.matmul %3, %68, %cst_26 {dimension_numbers = #tpu.dot_dimension_numbers<[1], [0], [0], [1], [0, 0, 1, 1], [], []>} : vector<64x64xbf16>, vector<64x256xbf16>, vector<64x256xf32> -> vector<64x256xf32>
    %70 = vector.broadcast %4 : vector<64x1xf32> to vector<64x256xf32>
    %71 = arith.addf %69, %70 : vector<64x256xf32>
    %cst_27 = arith.constant 0.000000e+00 : f32
    %72 = vector.broadcast %cst_27 : f32 to vector<64x256xf32>
    %73 = arith.maximumf %71, %72 : vector<64x256xf32>
    %74 = vector.broadcast %5 : vector<64x1xf32> to vector<64x256xf32>
    %75 = arith.mulf %74, %73 : vector<64x256xf32>
    %cst_28 = arith.constant dense<0.000000e+00> : vector<256xf32>
    %76 = vector.multi_reduction <add>, %75, %cst_28 [0] : vector<64x256xf32> to vector<256xf32>
    %77 = vector.shape_cast %76 : vector<256xf32> to vector<1x256xf32>
    %78 = vector.broadcast %6 : f32 to vector<1x256xf32>
    %79 = arith.addf %77, %78 : vector<1x256xf32>
    %c0_29 = arith.constant 0 : index
    %80 = arith.index_cast %58 : i32 to index
    %81 = vector.load %arg8[%c0_29, %80] : memref<1x1024xf32, #tpu.memory_space<vmem>>, vector<1x256xf32>
    tpu.vector_store %arg8[%c0_29, %80], %79 {strides = array<i32>} : memref<1x1024xf32, #tpu.memory_space<vmem>>, vector<1x256xf32>,
    %c3_i32 = arith.constant 3 : i32
    %c256_i32_30 = arith.constant 256 : i32
    %82 = arith.muli %c3_i32, %c256_i32_30 : i32
    %83 = tpu.assume_multiple %82, 128 : i32
    %c0_31 = arith.constant 0 : index
    %84 = arith.index_cast %83 : i32 to index
    %85 = vector.load %arg1[%c0_31, %84] : memref<1x1024xf32, #tpu.memory_space<vmem>>, vector<1x256xf32>
    %86 = vector.broadcast %0 : vector<64x1xf32> to vector<64x256xf32>
    %87 = vector.broadcast %85 : vector<1x256xf32> to vector<64x256xf32>
    %88 = arith.mulf %86, %87 : vector<64x256xf32>
    %89 = vector.broadcast %1 : vector<64x1xf32> to vector<64x256xf32>
    %90 = arith.addf %88, %89 : vector<64x256xf32>
    %cst_32 = arith.constant 0.000000e+00 : f32
    %91 = vector.broadcast %cst_32 : f32 to vector<64x256xf32>
    %92 = arith.maximumf %90, %91 : vector<64x256xf32>
    %93 = arith.truncf %92 : vector<64x256xf32> to vector<64x256xbf16>
    %cst_33 = arith.constant dense<0.000000e+00> : vector<64x256xf32>
    %94 = tpu.matmul %3, %93, %cst_33 {dimension_numbers = #tpu.dot_dimension_numbers<[1], [0], [0], [1], [0, 0, 1, 1], [], []>} : vector<64x64xbf16>, vector<64x256xbf16>, vector<64x256xf32> -> vector<64x256xf32>
    %95 = vector.broadcast %4 : vector<64x1xf32> to vector<64x256xf32>
    %96 = arith.addf %94, %95 : vector<64x256xf32>
    %cst_34 = arith.constant 0.000000e+00 : f32
    %97 = vector.broadcast %cst_34 : f32 to vector<64x256xf32>
    %98 = arith.maximumf %96, %97 : vector<64x256xf32>
    %99 = vector.broadcast %5 : vector<64x1xf32> to vector<64x256xf32>
    %100 = arith.mulf %99, %98 : vector<64x256xf32>
    %cst_35 = arith.constant dense<0.000000e+00> : vector<256xf32>
    %101 = vector.multi_reduction <add>, %100, %cst_35 [0] : vector<64x256xf32> to vector<256xf32>
    %102 = vector.shape_cast %101 : vector<256xf32> to vector<1x256xf32>
    %103 = vector.broadcast %6 : f32 to vector<1x256xf32>
    %104 = arith.addf %102, %103 : vector<1x256xf32>
    %c0_36 = arith.constant 0 : index
    %105 = arith.index_cast %83 : i32 to index
    %106 = vector.load %arg8[%c0_36, %105] : memref<1x1024xf32, #tpu.memory_space<vmem>>, vector<1x256xf32>
    tpu.vector_store %arg8[%c0_36, %105], %104 {strides = array<i32>} : memref<1x1024xf32, #tpu.memory_space<vmem>>, vector<1x256xf32>,
    %c4_i32 = arith.constant 4 : i32
    return
  }
  func.func @transform_0(%arg0: i32) -> (i32, i32) {
    %c0_i32 = arith.constant 0 : i32
    %c0_i32_0 = arith.constant 0 : i32
    return %c0_i32, %arg0 : i32, i32
  }
  func.func @transform_1(%arg0: i32) -> (i32, i32) {
    %c0_i32 = arith.constant 0 : i32
    %c0_i32_0 = arith.constant 0 : i32
    %c0_i32_1 = arith.constant 0 : i32
    return %c0_i32, %c0_i32_0 : i32, i32
  }
  func.func @transform_2(%arg0: i32) -> (i32, i32) {
    %c0_i32 = arith.constant 0 : i32
    %c0_i32_0 = arith.constant 0 : i32
    %c0_i32_1 = arith.constant 0 : i32
    return %c0_i32, %c0_i32_0 : i32, i32
  }
  func.func @transform_3(%arg0: i32) -> (i32, i32) {
    %c0_i32 = arith.constant 0 : i32
    %c0_i32_0 = arith.constant 0 : i32
    %c0_i32_1 = arith.constant 0 : i32
    return %c0_i32, %c0_i32_0 : i32, i32
  }
  func.func @transform_4(%arg0: i32) -> (i32, i32) {
    %c0_i32 = arith.constant 0 : i32
    %c0_i32_0 = arith.constant 0 : i32
    %c0_i32_1 = arith.constant 0 : i32
    return %c0_i32, %c0_i32_0 : i32, i32
  }
  func.func @transform_5(%arg0: i32) -> (i32, i32) {
    %c0_i32 = arith.constant 0 : i32
    %c0_i32_0 = arith.constant 0 : i32
    %c0_i32_1 = arith.constant 0 : i32
    return %c0_i32, %c0_i32_0 : i32, i32
  }
  func.func @transform_6(%arg0: i32) -> (i32, i32) {
    %c0_i32 = arith.constant 0 : i32
    %c0_i32_0 = arith.constant 0 : i32
    %c0_i32_1 = arith.constant 0 : i32
    return %c0_i32, %c0_i32_0 : i32, i32
  }
  func.func @transform_7(%arg0: i32) -> (i32, i32) {
    %c0_i32 = arith.constant 0 : i32
    %c0_i32_0 = arith.constant 0 : i32
    return %c0_i32, %arg0 : i32, i32
  }
}

</mosaic_0001>

<llo_original>
// kernel: tpu_custom_call.1
$region0: #{tpu_custom_call.1}
  #allocation0 [shape = 'u32[]', space=smem, size = 0x4, offset = 0x4, fixed_abs, tag = 'smem constant byte address 0x4 - core index']
  #allocation1 [shape = 'u32[144,128]{1,0:T(1,128)}', space=vmem, size = 0x12000, scoped, tag = 'internal scratch']
  #allocation2 [shape = 'f32[1,1]{1,0:T(1,128)S(6)}', space=smem, size = 0x200, scoped, tag = 'scoped memory for tpu_custom_call.1']
  %s0 = inlined_call_operand.vmem [shape: f32[1,2048], index: 0, kind: input, shape index: {}]
  %s1 = inlined_call_operand.vmem [shape: f32[64,1], index: 1, kind: input, shape index: {}]
  %s2 = inlined_call_operand.vmem [shape: f32[64,1], index: 2, kind: input, shape index: {}]
  %s3 = inlined_call_operand.vmem [shape: f32[64,64], index: 3, kind: input, shape index: {}]
  %s4 = inlined_call_operand.vmem [shape: f32[64,1], index: 4, kind: input, shape index: {}]
  %s5 = inlined_call_operand.vmem [shape: f32[64,1], index: 5, kind: input, shape index: {}]
  %s6 = inlined_call_operand.<no memory space> [shape: f32[1,1], index: 6, kind: input, shape index: {}]
  %s7 = inlined_call_operand.hbm [shape: f32[1,2048], index: 7, kind: output, shape index: {}]
  %s8 = sld [smem:[#allocation0]]
  $region61: #{tpu_custom_call.1} parent=0
    _
  %s10 = ssub.s32 1, %s8
  %s11 = scalar_select 0, %s10, %s8
  %12 = sst [smem:[#allocation2]] %s6
  $region1: #{tpu_custom_call.1} parent=0
    #allocation3 [shape = 'u8[8192]{0}', space=vmem, size = 0x2000, scoped, tag = 'output window, operand 0']
    #allocation4 [shape = 's32[2]{0}', space=sflag, size = 0x8, scoped, tag = 'scoped memory for tpu_custom_call.1']
    %13 = vsyncpa [#allocation4], 0
    %s14 = scalar_lea.sflag [#allocation4], 1
    %15 = vsyncpa %s14, 0
    loop: start=0, step=1, limit=4
    $region2: #{tpu_custom_call.1} parent=1 // loop_pre_header
      _
    $region3: #{tpu_custom_call.1} parent=1 // loop_header
      %s17 = sphi 0, %s21
      %p18 = scmp.ge.s32.totalorder %s17, 4
      %s27 = sphi 0, %s29
      %s30 = sphi 0, %s27
      %s31 = sphi 0, %s30
      %s47 = sphi 0, %s31
      %s51 = sphi 0, %s51
      %s53 = sphi 0, %s51
      %s54 = sphi 0, %s53
      %s68 = sphi 0, %s54
      %s72 = sphi 0, %s72
      %s74 = sphi 0, %s72
      %s75 = sphi 0, %s74
      %s89 = sphi 0, %s75
      %s93 = sphi 0, %s93
      %s95 = sphi 0, %s93
      %s96 = sphi 0, %s95
      %s110 = sphi 0, %s96
      %s114 = sphi 0, %s114
      %s116 = sphi 0, %s114
      %s117 = sphi 0, %s116
      %s131 = sphi 0, %s117
      %s135 = sphi 0, %s135
      %s137 = sphi 0, %s135
      %s138 = sphi 0, %s137
      %s152 = sphi 0, %s138
      %s156 = sphi 0, %s156
      %s158 = sphi 0, %s156
      %s159 = sphi 0, %s158
      %s173 = sphi 0, %s159
      %s179 = sphi 0, %s181
      %s182 = sphi 0, %s179
      %s183 = sphi 0, %s182
      %s199 = sphi 0, %s183
    $region4: #{tpu_custom_call.1} parent=1 // loop_header_branch
      %20 = sbr.rel (%p18) target = $region8
    $region5: #{tpu_custom_call.1} parent=1 // loop_body
      %s22 = ssub.s32 %s17, 1
      %s23 = ssub.s32 %s17, 2
      %s24 = sadd.s32 %s17, 1
      %s25 = ssub.s32 %s17, %s24
      %p26 = scmp.eq.s32.totalorder %s25, 0
      %s28 = sadd.s32 %s27, 1
      %s29 = scalar_select %p26, %s27, %s28
      %p32 = pneg %p26
      %p33 = scmp.eq.s32.totalorder %s17, 1
      %p34 = por %p32, %p33
      %p35 = scmp.ne.s32.totalorder %s27, %s30
      %p36 = scmp.eq.s32.totalorder %s17, 0
      %p37 = por %p35, %p36
      %p38 = scmp.ne.s32.totalorder %s27, %s30
      %p39 = scmp.eq.s32.totalorder %s22, 1
      %p40 = por %p38, %p39
      %p41 = scmp.ne.s32.totalorder %s30, %s31
      %p42 = scmp.eq.s32.totalorder %s22, 0
      %p43 = por %p41, %p42
      %p44 = scmp.ne.s32.totalorder %s30, %s31
      %p45 = scmp.eq.s32.totalorder %s23, 1
      %p46 = por %p44, %p45
      %p48 = scmp.ne.s32.totalorder %s31, %s47
      %p49 = scmp.eq.s32.totalorder %s23, 0
      %p50 = por %p48, %p49
      %s52 = sadd.s32 %s51, 1
      %p55 = scmp.eq.s32.totalorder %s17, 1
      %p56 = scmp.ne.s32.totalorder %s51, %s53
      %p57 = scmp.eq.s32.totalorder %s17, 0
      %p58 = por %p56, %p57
      %p59 = scmp.ne.s32.totalorder %s51, %s53
      %p60 = scmp.eq.s32.totalorder %s22, 1
      %p61 = por %p59, %p60
      %p62 = scmp.ne.s32.totalorder %s53, %s54
      %p63 = scmp.eq.s32.totalorder %s22, 0
      %p64 = por %p62, %p63
      %p65 = scmp.ne.s32.totalorder %s53, %s54
      %p66 = scmp.eq.s32.totalorder %s23, 1
      %p67 = por %p65, %p66
      %p69 = scmp.ne.s32.totalorder %s54, %s68
      %p70 = scmp.eq.s32.totalorder %s23, 0
      %p71 = por %p69, %p70
      %s73 = sadd.s32 %s72, 1
      %p76 = scmp.eq.s32.totalorder %s17, 1
      %p77 = scmp.ne.s32.totalorder %s72, %s74
      %p78 = scmp.eq.s32.totalorder %s17, 0
      %p79 = por %p77, %p78
      %p80 = scmp.ne.s32.totalorder %s72, %s74
      %p81 = scmp.eq.s32.totalorder %s22, 1
      %p82 = por %p80, %p81
      %p83 = scmp.ne.s32.totalorder %s74, %s75
      %p84 = scmp.eq.s32.totalorder %s22, 0
      %p85 = por %p83, %p84
      %p86 = scmp.ne.s32.totalorder %s74, %s75
      %p87 = scmp.eq.s32.totalorder %s23, 1
      %p88 = por %p86, %p87
      %p90 = scmp.ne.s32.totalorder %s75, %s89
      %p91 = scmp.eq.s32.totalorder %s23, 0
      %p92 = por %p90, %p91
      %s94 = sadd.s32 %s93, 1
      %p97 = scmp.eq.s32.totalorder %s17, 1
      %p98 = scmp.ne.s32.totalorder %s93, %s95
      %p99 = scmp.eq.s32.totalorder %s17, 0
      %p100 = por %p98, %p99
      %p101 = scmp.ne.s32.totalorder %s93, %s95
      %p102 = scmp.eq.s32.totalorder %s22, 1
      %p103 = por %p101, %p102
      %p104 = scmp.ne.s32.totalorder %s95, %s96
      %p105 = scmp.eq.s32.totalorder %s22, 0
      %p106 = por %p104, %p105
      %p107 = scmp.ne.s32.totalorder %s95, %s96
      %p108 = scmp.eq.s32.totalorder %s23, 1
      %p109 = por %p107, %p108
      %p111 = scmp.ne.s32.totalorder %s96, %s110
      %p112 = scmp.eq.s32.totalorder %s23, 0
      %p113 = por %p111, %p112
      %s115 = sadd.s32 %s114, 1
      %p118 = scmp.eq.s32.totalorder %s17, 1
      %p119 = scmp.ne.s32.totalorder %s114, %s116
      %p120 = scmp.eq.s32.totalorder %s17, 0
      %p121 = por %p119, %p120
      %p122 = scmp.ne.s32.totalorder %s114, %s116
      %p123 = scmp.eq.s32.totalorder %s22, 1
      %p124 = por %p122, %p123
      %p125 = scmp.ne.s32.totalorder %s116, %s117
      %p126 = scmp.eq.s32.totalorder %s22, 0
      %p127 = por %p125, %p126
      %p128 = scmp.ne.s32.totalorder %s116, %s117
      %p129 = scmp.eq.s32.totalorder %s23, 1
      %p130 = por %p128, %p129
      %p132 = scmp.ne.s32.totalorder %s117, %s131
      %p133 = scmp.eq.s32.totalorder %s23, 0
      %p134 = por %p132, %p133
      %s136 = sadd.s32 %s135, 1
      %p139 = scmp.eq.s32.totalorder %s17, 1
      %p140 = scmp.ne.s32.totalorder %s135, %s137
      %p141 = scmp.eq.s32.totalorder %s17, 0
      %p142 = por %p140, %p141
      %p143 = scmp.ne.s32.totalorder %s135, %s137
      %p144 = scmp.eq.s32.totalorder %s22, 1
      %p145 = por %p143, %p144
      %p146 = scmp.ne.s32.totalorder %s137, %s138
      %p147 = scmp.eq.s32.totalorder %s22, 0
      %p148 = por %p146, %p147
      %p149 = scmp.ne.s32.totalorder %s137, %s138
      %p150 = scmp.eq.s32.totalorder %s23, 1
      %p151 = por %p149, %p150
      %p153 = scmp.ne.s32.totalorder %s138, %s152
      %p154 = scmp.eq.s32.totalorder %s23, 0
      %p155 = por %p153, %p154
      %s157 = sadd.s32 %s156, 1
      %p160 = scmp.eq.s32.totalorder %s17, 1
      %p161 = scmp.ne.s32.totalorder %s156, %s158
      %p162 = scmp.eq.s32.totalorder %s17, 0
      %p163 = por %p161, %p162
      %p164 = scmp.ne.s32.totalorder %s156, %s158
      %p165 = scmp.eq.s32.totalorder %s22, 1
      %p166 = por %p164, %p165
      %p167 = scmp.ne.s32.totalorder %s158, %s159
      %p168 = scmp.eq.s32.totalorder %s22, 0
      %p169 = por %p167, %p168
      %p170 = scmp.ne.s32.totalorder %s158, %s159
      %p171 = scmp.eq.s32.totalorder %s23, 1
      %p172 = por %p170, %p171
      %p174 = scmp.ne.s32.totalorder %s159, %s173
      %p175 = scmp.eq.s32.totalorder %s23, 0
      %p176 = por %p174, %p175
      %s177 = ssub.s32 %s17, %s24
      %p178 = scmp.eq.s32.totalorder %s177, 0
      %s180 = sadd.s32 %s179, 1
      %s181 = scalar_select %p178, %s179, %s180
      %p184 = pneg %p178
      %p185 = scmp.eq.s32.totalorder %s17, 1
      %p186 = por %p184, %p185
      %p187 = scmp.ne.s32.totalorder %s179, %s182
      %p188 = scmp.eq.s32.totalorder %s17, 0
      %p189 = por %p187, %p188
      %p190 = scmp.ne.s32.totalorder %s179, %s182
      %p191 = scmp.eq.s32.totalorder %s22, 1
      %p192 = por %p190, %p191
      %p193 = scmp.ne.s32.totalorder %s182, %s183
      %p194 = scmp.eq.s32.totalorder %s22, 0
      %p195 = por %p193, %p194
      %p196 = scmp.ne.s32.totalorder %s182, %s183
      %p197 = scmp.eq.s32.totalorder %s23, 1
      %p198 = por %p196, %p197
      %p200 = scmp.ne.s32.totalorder %s183, %s199
      %p201 = scmp.eq.s32.totalorder %s23, 0
      %p202 = por %p200, %p201
      %p203 = scmp.le.s32.totalorder 1, %s17
      %p204 = scmp.lt.s32.totalorder %s17, 3
      %p205 = pnand %p203, %p204
      %p206 = pneg %p205
      // Predicated region
      $region9: #{tpu_custom_call.1} parent=5 // pred_check
        _
      $region10: #{tpu_custom_call.1} parent=5 // pred_check_branch
        %208 = sbr.rel (%p205) target = $region12
      $region11: #{tpu_custom_call.1} parent=5 // pred_region
        %s209 = ssub.s32 %s17, 1
        // Predicated region
        $region13: #{tpu_custom_call.1} parent=11 // pred_check
          %p210 = pneg %p64
        $region14: #{tpu_custom_call.1} parent=11 // pred_check_branch
          %212 = sbr.rel (%p210) target = $region16
        $region15: #{tpu_custom_call.1} parent=11 // pred_region
          _
        $region16: #{tpu_custom_call.1} parent=11 // pred_fallthru
          _
        // Predicated region
        $region17: #{tpu_custom_call.1} parent=11 // pred_check
          %p213 = pneg %p85
        $region18: #{tpu_custom_call.1} parent=11 // pred_check_branch
          %215 = sbr.rel (%p213) target = $region20
        $region19: #{tpu_custom_call.1} parent=11 // pred_region
          _
        $region20: #{tpu_custom_call.1} parent=11 // pred_fallthru
          _
        // Predicated region
        $region21: #{tpu_custom_call.1} parent=11 // pred_check
          %p216 = pneg %p106
        $region22: #{tpu_custom_call.1} parent=11 // pred_check_branch
          %218 = sbr.rel (%p216) target = $region24
        $region23: #{tpu_custom_call.1} parent=11 // pred_region
          _
        $region24: #{tpu_custom_call.1} parent=11 // pred_fallthru
          _
        // Predicated region
        $region25: #{tpu_custom_call.1} parent=11 // pred_check
          %p219 = pneg %p127
        $region26: #{tpu_custom_call.1} parent=11 // pred_check_branch
          %221 = sbr.rel (%p219) target = $region28
        $region27: #{tpu_custom_call.1} parent=11 // pred_region
          _
        $region28: #{tpu_custom_call.1} parent=11 // pred_fallthru
          _
        // Predicated region
        $region29: #{tpu_custom_call.1} parent=11 // pred_check
          %p222 = pneg %p148
        $region30: #{tpu_custom_call.1} parent=11 // pred_check_branch
          %224 = sbr.rel (%p222) target = $region32
        $region31: #{tpu_custom_call.1} parent=11 // pred_region
          _
        $region32: #{tpu_custom_call.1} parent=11 // pred_fallthru
          _
        // Predicated region
        $region33: #{tpu_custom_call.1} parent=11 // pred_check
          %p225 = pneg %p169
        $region34: #{tpu_custom_call.1} parent=11 // pred_check_branch
          %227 = sbr.rel (%p225) target = $region36
        $region35: #{tpu_custom_call.1} parent=11 // pred_region
          _
        $region36: #{tpu_custom_call.1} parent=11 // pred_fallthru
          _
      $region12: #{tpu_custom_call.1} parent=5 // pred_fallthru
        _
      %p228 = scmp.lt.s32.totalorder %s17, 2
      // Predicated region
      $region37: #{tpu_custom_call.1} parent=5 // pred_check
        %p229 = pneg %p228
      $region38: #{tpu_custom_call.1} parent=5 // pred_check_branch
        %231 = sbr.rel (%p229) target = $region40
      $region39: #{tpu_custom_call.1} parent=5 // pred_region
        // Predicated region
        $region41: #{tpu_custom_call.1} parent=39 // pred_check
          %p232 = pneg %p37
        $region42: #{tpu_custom_call.1} parent=39 // pred_check_branch
          %234 = sbr.rel (%p232) target = $region44
        $region43: #{tpu_custom_call.1} parent=39 // pred_region
          %s235 = smul.u32 8, %s17
          %p236 = scmp.lt.s32.totalorder %s235, 15
          %s237 = scalar_select %p236, %s235, 15
          %s238 = scalar_lea.vmem %s0, %s237
          %s239 = smul.u32 8, %s17
        $region44: #{tpu_custom_call.1} parent=39 // pred_fallthru
          _
      $region40: #{tpu_custom_call.1} parent=5 // pred_fallthru
        _
      %p240 = scmp.le.s32.totalorder 1, %s17
      %p241 = scmp.lt.s32.totalorder %s17, 3
      %p242 = pnand %p240, %p241
      %p243 = pneg %p242
      // Predicated region
      $region45: #{tpu_custom_call.1} parent=5 // pred_check
        _
      $region46: #{tpu_custom_call.1} parent=5 // pred_check_branch
        %245 = sbr.rel (%p242) target = $region48
      $region47: #{tpu_custom_call.1} parent=5 // pred_region
        %s246 = ssub.s32 %s17, 1
        %s247 = smul.u32 8, %s22
        %p248 = scmp.lt.s32.totalorder %s247, 15
        %s249 = scalar_select %p248, %s247, 15
        %s250 = scalar_lea.vmem %s0, %s249
        %p251 = pneg %p43
        %p252 = pneg %p40
        %p253 = pneg %p64
        %p254 = pneg %p61
        %p255 = pneg %p85
        %p256 = pneg %p82
        %p257 = pneg %p106
        %p258 = pneg %p103
        %p259 = pneg %p127
        %p260 = pneg %p124
        %p261 = pneg %p148
        %p262 = pneg %p145
        %p263 = pneg %p169
        %p264 = pneg %p166
        %p265 = pneg %p195
        %p266 = pneg %p192
        %s267 = sand.u32 %s182, 1
        %s268 = scalar_lea.sflag [#allocation4], %s267
        %s269 = sand.u32 %s182, 1
        %s270 = smul.addr %s269, 8
        %s271 = scalar_lea.vmem [#allocation3], %s270
        %s272 = smul.u32 8, %s22
        %p273 = scmp.lt.s32.totalorder %s272, 15
        %s274 = scalar_select %p273, %s272, 15
        %s275 = scalar_lea.vmem %s0, %s274
        %s276 = smul.u32 8, %s22
        %s277 = smul.u32 8, %s22
        %v279 = vld [vmem:[%s1] sm:$0xff]
        %v280 = vld [vmem:[%s1 + $0x8] sm:$0xff]
        %v281 = vld [vmem:[%s1 + $0x10] sm:$0xff]
        %v282 = vld [vmem:[%s1 + $0x18] sm:$0xff]
        %v283 = vld [vmem:[%s1 + $0x20] sm:$0xff]
        %v284 = vld [vmem:[%s1 + $0x28] sm:$0xff]
        %v285 = vld [vmem:[%s1 + $0x30] sm:$0xff]
        %v286 = vld [vmem:[%s1 + $0x38] sm:$0xff]
        %v287 = vld [vmem:[%s2] sm:$0xff]
        %v288 = vld [vmem:[%s2 + $0x8] sm:$0xff]
        %v289 = vld [vmem:[%s2 + $0x10] sm:$0xff]
        %v290 = vld [vmem:[%s2 + $0x18] sm:$0xff]
        %v291 = vld [vmem:[%s2 + $0x20] sm:$0xff]
        %v292 = vld [vmem:[%s2 + $0x28] sm:$0xff]
        %v293 = vld [vmem:[%s2 + $0x30] sm:$0xff]
        %v294 = vld [vmem:[%s2 + $0x38] sm:$0xff]
        %v295 = vld [vmem:[%s3] sm:$0xff]
        %v296 = vld [vmem:[%s3 + $0x8] sm:$0xff]
        %v297 = vld [vmem:[%s3 + $0x10] sm:$0xff]
        %v298 = vld [vmem:[%s3 + $0x18] sm:$0xff]
        %v299 = vld [vmem:[%s3 + $0x20] sm:$0xff]
        %v300 = vld [vmem:[%s3 + $0x28] sm:$0xff]
        %v301 = vld [vmem:[%s3 + $0x30] sm:$0xff]
        %v302 = vld [vmem:[%s3 + $0x38] sm:$0xff]
        %v303 = vpack.c.bf16 %v296, %v295
        %v304 = vpack.c.bf16 %v298, %v297
        %v305 = vpack.c.bf16 %v300, %v299
        %v306 = vpack.c.bf16 %v302, %v301
        %v307 = vld [vmem:[%s4] sm:$0xff]
        %v308 = vld [vmem:[%s4 + $0x8] sm:$0xff]
        %v309 = vld [vmem:[%s4 + $0x10] sm:$0xff]
        %v310 = vld [vmem:[%s4 + $0x18] sm:$0xff]
        %v311 = vld [vmem:[%s4 + $0x20] sm:$0xff]
        %v312 = vld [vmem:[%s4 + $0x28] sm:$0xff]
        %v313 = vld [vmem:[%s4 + $0x30] sm:$0xff]
        %v314 = vld [vmem:[%s4 + $0x38] sm:$0xff]
        %v315 = vld [vmem:[%s5] sm:$0xff]
        %v316 = vld [vmem:[%s5 + $0x8] sm:$0xff]
        %v317 = vld [vmem:[%s5 + $0x10] sm:$0xff]
        %v318 = vld [vmem:[%s5 + $0x18] sm:$0xff]
        %v319 = vld [vmem:[%s5 + $0x20] sm:$0xff]
        %v320 = vld [vmem:[%s5 + $0x28] sm:$0xff]
        %v321 = vld [vmem:[%s5 + $0x30] sm:$0xff]
        %v322 = vld [vmem:[%s5 + $0x38] sm:$0xff]
        %s323 = sld [smem:[#allocation2]]
        %v324 = vld [vmem:[%s275] sm:$0x3]
        %326 = vset.pattern.permute.xlu0 0
        %327 = vperm.xlu0 %326, %v279
        %v328 = vpop.permute.xlu0 %327
        %331 = vset.pattern.permute.xlu0 0
        %332 = vperm.xlu0 %331, %v280
        %v333 = vpop.permute.xlu0 %332
        %336 = vset.pattern.permute.xlu0 0
        %337 = vperm.xlu0 %336, %v281
        %v338 = vpop.permute.xlu0 %337
        %341 = vset.pattern.permute.xlu0 0
        %342 = vperm.xlu0 %341, %v282
        %v343 = vpop.permute.xlu0 %342
        %346 = vset.pattern.permute.xlu0 0
        %347 = vperm.xlu0 %346, %v283
        %v348 = vpop.permute.xlu0 %347
        %351 = vset.pattern.permute.xlu0 0
        %352 = vperm.xlu0 %351, %v284
        %v353 = vpop.permute.xlu0 %352
        %356 = vset.pattern.permute.xlu0 0
        %357 = vperm.xlu0 %356, %v285
        %v358 = vpop.permute.xlu0 %357
        %361 = vset.pattern.permute.xlu0 0
        %362 = vperm.xlu0 %361, %v286
        %v363 = vpop.permute.xlu0 %362
        %v366 = vlaneseq
        %v367 = vshrl.u32 %v366, 7
        %v368 = vsub.s32 0, %v367
        %v369 = vrot.slane %v324, %v368
        %v370 = vlaneseq
        %v371 = vshrl.u32 %v370, 7
        %v372 = vsub.s32 1, %v371
        %v373 = vrot.slane %v324, %v372
        %v376 = vmul.f32 %v328, %v369
        %v377 = vmul.f32 %v328, %v373
        %v378 = vmul.f32 %v333, %v369
        %v379 = vmul.f32 %v333, %v373
        %v380 = vmul.f32 %v338, %v369
        %v381 = vmul.f32 %v338, %v373
        %v382 = vmul.f32 %v343, %v369
        %v383 = vmul.f32 %v343, %v373
        %v384 = vmul.f32 %v348, %v369
        %v385 = vmul.f32 %v348, %v373
        %v386 = vmul.f32 %v353, %v369
        %v387 = vmul.f32 %v353, %v373
        %v388 = vmul.f32 %v358, %v369
        %v389 = vmul.f32 %v358, %v373
        %v390 = vmul.f32 %v363, %v369
        %v391 = vmul.f32 %v363, %v373
        %393 = vset.pattern.permute.xlu0 0
        %394 = vperm.xlu0 %393, %v287
        %v395 = vpop.permute.xlu0 %394
        %398 = vset.pattern.permute.xlu0 0
        %399 = vperm.xlu0 %398, %v288
        %v400 = vpop.permute.xlu0 %399
        %403 = vset.pattern.permute.xlu0 0
        %404 = vperm.xlu0 %403, %v289
        %v405 = vpop.permute.xlu0 %404
        %408 = vset.pattern.permute.xlu0 0
        %409 = vperm.xlu0 %408, %v290
        %v410 = vpop.permute.xlu0 %409
        %413 = vset.pattern.permute.xlu0 0
        %414 = vperm.xlu0 %413, %v291
        %v415 = vpop.permute.xlu0 %414
        %418 = vset.pattern.permute.xlu0 0
        %419 = vperm.xlu0 %418, %v292
        %v420 = vpop.permute.xlu0 %419
        %423 = vset.pattern.permute.xlu0 0
        %424 = vperm.xlu0 %423, %v293
        %v425 = vpop.permute.xlu0 %424
        %428 = vset.pattern.permute.xlu0 0
        %429 = vperm.xlu0 %428, %v294
        %v430 = vpop.permute.xlu0 %429
        %v432 = vadd.f32 %v376, %v395
        %v433 = vadd.f32 %v377, %v395
        %v434 = vadd.f32 %v378, %v400
        %v435 = vadd.f32 %v379, %v400
        %v436 = vadd.f32 %v380, %v405
        %v437 = vadd.f32 %v381, %v405
        %v438 = vadd.f32 %v382, %v410
        %v439 = vadd.f32 %v383, %v410
        %v440 = vadd.f32 %v384, %v415
        %v441 = vadd.f32 %v385, %v415
        %v442 = vadd.f32 %v386, %v420
        %v443 = vadd.f32 %v387, %v420
        %v444 = vadd.f32 %v388, %v425
        %v445 = vadd.f32 %v389, %v425
        %v446 = vadd.f32 %v390, %v430
        %v447 = vadd.f32 %v391, %v430
        %v448 = vmax.f32 %v432, 0.0
        %v449 = vmax.f32 %v433, 0.0
        %v450 = vmax.f32 %v434, 0.0
        %v451 = vmax.f32 %v435, 0.0
        %v452 = vmax.f32 %v436, 0.0
        %v453 = vmax.f32 %v437, 0.0
        %v454 = vmax.f32 %v438, 0.0
        %v455 = vmax.f32 %v439, 0.0
        %v456 = vmax.f32 %v440, 0.0
        %v457 = vmax.f32 %v441, 0.0
        %v458 = vmax.f32 %v442, 0.0
        %v459 = vmax.f32 %v443, 0.0
        %v460 = vmax.f32 %v444, 0.0
        %v461 = vmax.f32 %v445, 0.0
        %v462 = vmax.f32 %v446, 0.0
        %v463 = vmax.f32 %v447, 0.0
        %v464 = vpack.c.bf16 %v450, %v448
        %v465 = vpack.c.bf16 %v451, %v449
        %v466 = vpack.c.bf16 %v454, %v452
        %v467 = vpack.c.bf16 %v455, %v453
        %v468 = vpack.c.bf16 %v458, %v456
        %v469 = vpack.c.bf16 %v459, %v457
        %v470 = vpack.c.bf16 %v462, %v460
        %v471 = vpack.c.bf16 %v463, %v461
        %473 = vset.pattern.permute.xlu0 0
        %474 = vperm.xlu0 %473, %v307
        %v475 = vpop.permute.xlu0 %474
        %478 = vset.pattern.permute.xlu0 0
        %479 = vperm.xlu0 %478, %v308
        %v480 = vpop.permute.xlu0 %479
        %483 = vset.pattern.permute.xlu0 0
        %484 = vperm.xlu0 %483, %v309
        %v485 = vpop.permute.xlu0 %484
        %488 = vset.pattern.permute.xlu0 0
        %489 = vperm.xlu0 %488, %v310
        %v490 = vpop.permute.xlu0 %489
        %493 = vset.pattern.permute.xlu0 0
        %494 = vperm.xlu0 %493, %v311
        %v495 = vpop.permute.xlu0 %494
        %498 = vset.pattern.permute.xlu0 0
        %499 = vperm.xlu0 %498, %v312
        %v500 = vpop.permute.xlu0 %499
        %503 = vset.pattern.permute.xlu0 0
        %504 = vperm.xlu0 %503, %v313
        %v505 = vpop.permute.xlu0 %504
        %508 = vset.pattern.permute.xlu0 0
        %509 = vperm.xlu0 %508, %v314
        %v510 = vpop.permute.xlu0 %509
        %vm512 = vcmask 523264
        %v514 = vsel %vm512, %v303, 0
        %v517 = vsel %vm512, %v304, 0
        %v520 = vsel %vm512, %v305, 0
        %v523 = vsel %vm512, %v306, 0
        %525 = vmatprep.subr.bf16.mxu0 %v465
        %526 = vmatpush1.bf16.msra.mxu0 %v464
        %527 = vmatprep.subr.bf16.mxu0 %v467
        %528 = vmatpush1.bf16.msra.mxu0 %v466
        %529 = vmatprep.subr.bf16.mxu0 %v469
        %530 = vmatpush1.bf16.msra.mxu0 %v468
        %531 = vmatprep.subr.bf16.mxu0 %v471
        %532 = vmatpush1.bf16.msra.mxu0 %v470
        %533 = vmatprep.subr.bf16.mxu0 0
        %534 = vmatpush1.bf16.msra.mxu0 0
        %535 = vmatprep.subr.bf16.mxu0 0
        %536 = vmatpush1.bf16.msra.mxu0 0
        %537 = vmatprep.subr.bf16.mxu0 0
        %538 = vmatpush1.bf16.msra.mxu0 0
        %539 = vmatprep.subr.bf16.mxu0 0
        %540 = vmatpush1.bf16.msra.mxu0 0
        %541 = vmatprep.subr.bf16.mxu0 0
        %542 = vmatpush1.bf16.msra.mxu0 0
        %543 = vmatprep.subr.bf16.mxu0 0
        %544 = vmatpush1.bf16.msra.mxu0 0
        %545 = vmatprep.subr.bf16.mxu0 0
        %546 = vmatpush1.bf16.msra.mxu0 0
        %547 = vmatprep.subr.bf16.mxu0 0
        %548 = vmatpush1.bf16.msra.mxu0 0
        %549 = vmatprep.subr.bf16.mxu0 0
        %550 = vmatpush1.bf16.msra.mxu0 0
        %551 = vmatprep.subr.bf16.mxu0 0
        %552 = vmatpush1.bf16.msra.mxu0 0
        %553 = vmatprep.subr.bf16.mxu0 0
        %554 = vmatpush1.bf16.msra.mxu0 0
        %555 = vmatprep.subr.bf16.mxu0 0
        %556 = vmatpush1.bf16.msra.mxu0 0
        %557 = vmatprep.mubr.bf16.mxu0 0
        %558 = vmatmul.mubr.bf16.gmra.mrb[0].mxu0 %v514
        %v559 = vpop.f32.mrb[0].mxu0
        %v560 = vadd.f32 %v475, %v559
        %v561 = vpop.f32.mrb[0].mxu0
        %v562 = vadd.f32 %v475, %v561
        %v563 = vpop.f32.mrb[0].mxu0
        %v564 = vadd.f32 %v480, %v563
        %v565 = vpop.f32.mrb[0].mxu0
        %v566 = vadd.f32 %v480, %v565
        %567 = vmatprep.mubr.bf16.mxu0 0
        %568 = vmatmul.mubr.bf16.gmra.mrb[0].mxu0 %v517
        %v569 = vpop.f32.mrb[0].mxu0
        %v570 = vadd.f32 %v485, %v569
        %v571 = vpop.f32.mrb[0].mxu0
        %v572 = vadd.f32 %v485, %v571
        %v573 = vpop.f32.mrb[0].mxu0
        %v574 = vadd.f32 %v490, %v573
        %v575 = vpop.f32.mrb[0].mxu0
        %v576 = vadd.f32 %v490, %v575
        %577 = vmatprep.mubr.bf16.mxu0 0
        %578 = vmatmul.mubr.bf16.gmra.mrb[0].mxu0 %v520
        %v579 = vpop.f32.mrb[0].mxu0
        %v580 = vadd.f32 %v495, %v579
        %v581 = vpop.f32.mrb[0].mxu0
        %v582 = vadd.f32 %v495, %v581
        %v583 = vpop.f32.mrb[0].mxu0
        %v584 = vadd.f32 %v500, %v583
        %v585 = vpop.f32.mrb[0].mxu0
        %v586 = vadd.f32 %v500, %v585
        %587 = vmatprep.mubr.bf16.mxu0 0
        %588 = vmatmul.mubr.bf16.gmra.mrb[0].mxu0 %v523
        %v589 = vpop.f32.mrb[0].mxu0
        %v590 = vadd.f32 %v505, %v589
        %v591 = vpop.f32.mrb[0].mxu0
        %v592 = vadd.f32 %v505, %v591
        %v593 = vpop.f32.mrb[0].mxu0
        %v594 = vadd.f32 %v510, %v593
        %v595 = vpop.f32.mrb[0].mxu0
        %v596 = vadd.f32 %v510, %v595
        %597 = vdwg.mxu0
        %v598 = vmax.f32 %v560, 0.0
        %v599 = vmax.f32 %v562, 0.0
        %v600 = vmax.f32 %v564, 0.0
        %v601 = vmax.f32 %v566, 0.0
        %v602 = vmax.f32 %v570, 0.0
        %v603 = vmax.f32 %v572, 0.0
        %v604 = vmax.f32 %v574, 0.0
        %v605 = vmax.f32 %v576, 0.0
        %v606 = vmax.f32 %v580, 0.0
        %v607 = vmax.f32 %v582, 0.0
        %v608 = vmax.f32 %v584, 0.0
        %v609 = vmax.f32 %v586, 0.0
        %v610 = vmax.f32 %v590, 0.0
        %v611 = vmax.f32 %v592, 0.0
        %v612 = vmax.f32 %v594, 0.0
        %v613 = vmax.f32 %v596, 0.0
        %615 = vset.pattern.permute.xlu0 0
        %616 = vperm.xlu0 %615, %v315
        %v617 = vpop.permute.xlu0 %616
        %620 = vset.pattern.permute.xlu0 0
        %621 = vperm.xlu0 %620, %v316
        %v622 = vpop.permute.xlu0 %621
        %625 = vset.pattern.permute.xlu0 0
        %626 = vperm.xlu0 %625, %v317
        %v627 = vpop.permute.xlu0 %626
        %630 = vset.pattern.permute.xlu0 0
        %631 = vperm.xlu0 %630, %v318
        %v632 = vpop.permute.xlu0 %631
        %635 = vset.pattern.permute.xlu0 0
        %636 = vperm.xlu0 %635, %v319
        %v637 = vpop.permute.xlu0 %636
        %640 = vset.pattern.permute.xlu0 0
        %641 = vperm.xlu0 %640, %v320
        %v642 = vpop.permute.xlu0 %641
        %645 = vset.pattern.permute.xlu0 0
        %646 = vperm.xlu0 %645, %v321
        %v647 = vpop.permute.xlu0 %646
        %650 = vset.pattern.permute.xlu0 0
        %651 = vperm.xlu0 %650, %v322
        %v652 = vpop.permute.xlu0 %651
        %v654 = vmul.f32 %v617, %v598
        %v655 = vmul.f32 %v617, %v599
        %v656 = vmul.f32 %v622, %v600
        %v657 = vmul.f32 %v622, %v601
        %v658 = vmul.f32 %v627, %v602
        %v659 = vmul.f32 %v627, %v603
        %v660 = vmul.f32 %v632, %v604
        %v661 = vmul.f32 %v632, %v605
        %v662 = vmul.f32 %v637, %v606
        %v663 = vmul.f32 %v637, %v607
        %v664 = vmul.f32 %v642, %v608
        %v665 = vmul.f32 %v642, %v609
        %v666 = vmul.f32 %v647, %v610
        %v667 = vmul.f32 %v647, %v611
        %v668 = vmul.f32 %v652, %v612
        %v669 = vmul.f32 %v652, %v613
        %v670 = vadd.f32 %v654, %v656
        %v671 = vadd.f32 %v670, %v658
        %v672 = vadd.f32 %v671, %v660
        %v673 = vadd.f32 %v672, %v662
        %v674 = vadd.f32 %v673, %v664
        %v675 = vadd.f32 %v674, %v666
        %v676 = vadd.f32 %v675, %v668
        %v677 = vrot.slane %v676, 4
        %v678 = vadd.f32 %v676, %v677
        %v679 = vrot.slane %v678, 2
        %v680 = vadd.f32 %v678, %v679
        %v681 = vrot.slane %v680, 1
        %v682 = vadd.f32 %v680, %v681
        %v683 = vadd.f32 %v655, %v657
        %v684 = vadd.f32 %v683, %v659
        %v685 = vadd.f32 %v684, %v661
        %v686 = vadd.f32 %v685, %v663
        %v687 = vadd.f32 %v686, %v665
        %v688 = vadd.f32 %v687, %v667
        %v689 = vadd.f32 %v688, %v669
        %v690 = vrot.slane %v689, 4
        %v691 = vadd.f32 %v689, %v690
        %v692 = vrot.slane %v691, 2
        %v693 = vadd.f32 %v691, %v692
        %v694 = vrot.slane %v693, 1
        %v695 = vadd.f32 %v693, %v694
        %v696 = vstv %s323
        %v697 = vadd.f32 %v682, %v696
        %v698 = vadd.f32 %v695, %v696
        %v701 = vcombine.low %v697, %v698
        %v703 = vunpack.c.l.s4 1966171168
        %v704 = vunpack.c.0.s8 %v703
        %v705 = vlaneseq
        %v706 = vshrl.u32 %v705, 7
        %v707 = vsub.s32 %v704, %v706
        %v708 = vrot.slane %v701, %v707
        %v710 = vunpack.c.l.s4 1966171168
        %v711 = vunpack.c.0.s8 %v710
        %v712 = vlaneseq
        %v713 = vshrl.u32 %v712, 7
        %v714 = vsub.s32 %v711, %v713
        %v715 = vrot.slane %v708, %v714
        %v717 = vlaneseq
        %vm718 = vcmp.ge.s32.totalorder %v717, 0
        %vm719 = vcmp.lt.s32.totalorder %v717, 256
        %vm720 = vmand %vm718, %vm719
        %721 = vst.msk [vmem:[%s271] sm:$0x3] %vm720, %v715
        %s722 = scalar_lea.vmem %s275, 2
        %v723 = vld [vmem:[%s722] sm:$0x3]
        %v725 = vlaneseq
        %v726 = vshrl.u32 %v725, 7
        %v727 = vsub.s32 0, %v726
        %v728 = vrot.slane %v723, %v727
        %v729 = vlaneseq
        %v730 = vshrl.u32 %v729, 7
        %v731 = vsub.s32 1, %v730
        %v732 = vrot.slane %v723, %v731
        %v735 = vmul.f32 %v328, %v728
        %v736 = vmul.f32 %v328, %v732
        %v737 = vmul.f32 %v333, %v728
        %v738 = vmul.f32 %v333, %v732
        %v739 = vmul.f32 %v338, %v728
        %v740 = vmul.f32 %v338, %v732
        %v741 = vmul.f32 %v343, %v728
        %v742 = vmul.f32 %v343, %v732
        %v743 = vmul.f32 %v348, %v728
        %v744 = vmul.f32 %v348, %v732
        %v745 = vmul.f32 %v353, %v728
        %v746 = vmul.f32 %v353, %v732
        %v747 = vmul.f32 %v358, %v728
        %v748 = vmul.f32 %v358, %v732
        %v749 = vmul.f32 %v363, %v728
        %v750 = vmul.f32 %v363, %v732
        %v751 = vadd.f32 %v735, %v395
        %v752 = vadd.f32 %v736, %v395
        %v753 = vadd.f32 %v737, %v400
        %v754 = vadd.f32 %v738, %v400
        %v755 = vadd.f32 %v739, %v405
        %v756 = vadd.f32 %v740, %v405
        %v757 = vadd.f32 %v741, %v410
        %v758 = vadd.f32 %v742, %v410
        %v759 = vadd.f32 %v743, %v415
        %v760 = vadd.f32 %v744, %v415
        %v761 = vadd.f32 %v745, %v420
        %v762 = vadd.f32 %v746, %v420
        %v763 = vadd.f32 %v747, %v425
        %v764 = vadd.f32 %v748, %v425
        %v765 = vadd.f32 %v749, %v430
        %v766 = vadd.f32 %v750, %v430
        %v767 = vmax.f32 %v751, 0.0
        %v768 = vmax.f32 %v752, 0.0
        %v769 = vmax.f32 %v753, 0.0
        %v770 = vmax.f32 %v754, 0.0
        %v771 = vmax.f32 %v755, 0.0
        %v772 = vmax.f32 %v756, 0.0
        %v773 = vmax.f32 %v757, 0.0
        %v774 = vmax.f32 %v758, 0.0
        %v775 = vmax.f32 %v759, 0.0
        %v776 = vmax.f32 %v760, 0.0
        %v777 = vmax.f32 %v761, 0.0
        %v778 = vmax.f32 %v762, 0.0
        %v779 = vmax.f32 %v763, 0.0
        %v780 = vmax.f32 %v764, 0.0
        %v781 = vmax.f32 %v765, 0.0
        %v782 = vmax.f32 %v766, 0.0
        %v783 = vpack.c.bf16 %v769, %v767
        %v784 = vpack.c.bf16 %v770, %v768
        %v785 = vpack.c.bf16 %v773, %v771
        %v786 = vpack.c.bf16 %v774, %v772
        %v787 = vpack.c.bf16 %v777, %v775
        %v788 = vpack.c.bf16 %v778, %v776
        %v789 = vpack.c.bf16 %v781, %v779
        %v790 = vpack.c.bf16 %v782, %v780
        %791 = vmatprep.subr.bf16.mxu0 %v784
        %792 = vmatpush1.bf16.msra.mxu0 %v783
        %793 = vmatprep.subr.bf16.mxu0 %v786
        %794 = vmatpush1.bf16.msra.mxu0 %v785
        %795 = vmatprep.subr.bf16.mxu0 %v788
        %796 = vmatpush1.bf16.msra.mxu0 %v787
        %797 = vmatprep.subr.bf16.mxu0 %v790
        %798 = vmatpush1.bf16.msra.mxu0 %v789
        %799 = vmatprep.subr.bf16.mxu0 0
        %800 = vmatpush1.bf16.msra.mxu0 0
        %801 = vmatprep.subr.bf16.mxu0 0
        %802 = vmatpush1.bf16.msra.mxu0 0
        %803 = vmatprep.subr.bf16.mxu0 0
        %804 = vmatpush1.bf16.msra.mxu0 0
        %805 = vmatprep.subr.bf16.mxu0 0
        %806 = vmatpush1.bf16.msra.mxu0 0
        %807 = vmatprep.subr.bf16.mxu0 0
        %808 = vmatpush1.bf16.msra.mxu0 0
        %809 = vmatprep.subr.bf16.mxu0 0
        %810 = vmatpush1.bf16.msra.mxu0 0
        %811 = vmatprep.subr.bf16.mxu0 0
        %812 = vmatpush1.bf16.msra.mxu0 0
        %813 = vmatprep.subr.bf16.mxu0 0
        %814 = vmatpush1.bf16.msra.mxu0 0
        %815 = vmatprep.subr.bf16.mxu0 0
        %816 = vmatpush1.bf16.msra.mxu0 0
        %817 = vmatprep.subr.bf16.mxu0 0
        %818 = vmatpush1.bf16.msra.mxu0 0
        %819 = vmatprep.subr.bf16.mxu0 0
        %820 = vmatpush1.bf16.msra.mxu0 0
        %821 = vmatprep.subr.bf16.mxu0 0
        %822 = vmatpush1.bf16.msra.mxu0 0
        %823 = vmatprep.mubr.bf16.mxu0 0
        %824 = vmatmul.mubr.bf16.gmra.mrb[0].mxu0 %v514
        %v825 = vpop.f32.mrb[0].mxu0
        %v826 = vadd.f32 %v475, %v825
        %v827 = vpop.f32.mrb[0].mxu0
        %v828 = vadd.f32 %v475, %v827
        %v829 = vpop.f32.mrb[0].mxu0
        %v830 = vadd.f32 %v480, %v829
        %v831 = vpop.f32.mrb[0].mxu0
        %v832 = vadd.f32 %v480, %v831
        %833 = vmatprep.mubr.bf16.mxu0 0
        %834 = vmatmul.mubr.bf16.gmra.mrb[0].mxu0 %v517
        %v835 = vpop.f32.mrb[0].mxu0
        %v836 = vadd.f32 %v485, %v835
        %v837 = vpop.f32.mrb[0].mxu0
        %v838 = vadd.f32 %v485, %v837
        %v839 = vpop.f32.mrb[0].mxu0
        %v840 = vadd.f32 %v490, %v839
        %v841 = vpop.f32.mrb[0].mxu0
        %v842 = vadd.f32 %v490, %v841
        %843 = vmatprep.mubr.bf16.mxu0 0
        %844 = vmatmul.mubr.bf16.gmra.mrb[0].mxu0 %v520
        %v845 = vpop.f32.mrb[0].mxu0
        %v846 = vadd.f32 %v495, %v845
        %v847 = vpop.f32.mrb[0].mxu0
        %v848 = vadd.f32 %v495, %v847
        %v849 = vpop.f32.mrb[0].mxu0
        %v850 = vadd.f32 %v500, %v849
        %v851 = vpop.f32.mrb[0].mxu0
        %v852 = vadd.f32 %v500, %v851
        %853 = vmatprep.mubr.bf16.mxu0 0
        %854 = vmatmul.mubr.bf16.gmra.mrb[0].mxu0 %v523
        %v855 = vpop.f32.mrb[0].mxu0
        %v856 = vadd.f32 %v505, %v855
        %v857 = vpop.f32.mrb[0].mxu0
        %v858 = vadd.f32 %v505, %v857
        %v859 = vpop.f32.mrb[0].mxu0
        %v860 = vadd.f32 %v510, %v859
        %v861 = vpop.f32.mrb[0].mxu0
        %v862 = vadd.f32 %v510, %v861
        %863 = vdwg.mxu0
        %v864 = vmax.f32 %v826, 0.0
        %v865 = vmax.f32 %v828, 0.0
        %v866 = vmax.f32 %v830, 0.0
        %v867 = vmax.f32 %v832, 0.0
        %v868 = vmax.f32 %v836, 0.0
        %v869 = vmax.f32 %v838, 0.0
        %v870 = vmax.f32 %v840, 0.0
        %v871 = vmax.f32 %v842, 0.0
        %v872 = vmax.f32 %v846, 0.0
        %v873 = vmax.f32 %v848, 0.0
        %v874 = vmax.f32 %v850, 0.0
        %v875 = vmax.f32 %v852, 0.0
        %v876 = vmax.f32 %v856, 0.0
        %v877 = vmax.f32 %v858, 0.0
        %v878 = vmax.f32 %v860, 0.0
        %v879 = vmax.f32 %v862, 0.0
        %v880 = vmul.f32 %v617, %v864
        %v881 = vmul.f32 %v617, %v865
        %v882 = vmul.f32 %v622, %v866
        %v883 = vmul.f32 %v622, %v867
        %v884 = vmul.f32 %v627, %v868
        %v885 = vmul.f32 %v627, %v869
        %v886 = vmul.f32 %v632, %v870
        %v887 = vmul.f32 %v632, %v871
        %v888 = vmul.f32 %v637, %v872
        %v889 = vmul.f32 %v637, %v873
        %v890 = vmul.f32 %v642, %v874
        %v891 = vmul.f32 %v642, %v875
        %v892 = vmul.f32 %v647, %v876
        %v893 = vmul.f32 %v647, %v877
        %v894 = vmul.f32 %v652, %v878
        %v895 = vmul.f32 %v652, %v879
        %v896 = vadd.f32 %v880, %v882
        %v897 = vadd.f32 %v896, %v884
        %v898 = vadd.f32 %v897, %v886
        %v899 = vadd.f32 %v898, %v888
        %v900 = vadd.f32 %v899, %v890
        %v901 = vadd.f32 %v900, %v892
        %v902 = vadd.f32 %v901, %v894
        %v903 = vrot.slane %v902, 4
        %v904 = vadd.f32 %v902, %v903
        %v905 = vrot.slane %v904, 2
        %v906 = vadd.f32 %v904, %v905
        %v907 = vrot.slane %v906, 1
        %v908 = vadd.f32 %v906, %v907
        %v909 = vadd.f32 %v881, %v883
        %v910 = vadd.f32 %v909, %v885
        %v911 = vadd.f32 %v910, %v887
        %v912 = vadd.f32 %v911, %v889
        %v913 = vadd.f32 %v912, %v891
        %v914 = vadd.f32 %v913, %v893
        %v915 = vadd.f32 %v914, %v895
        %v916 = vrot.slane %v915, 4
        %v917 = vadd.f32 %v915, %v916
        %v918 = vrot.slane %v917, 2
        %v919 = vadd.f32 %v917, %v918
        %v920 = vrot.slane %v919, 1
        %v921 = vadd.f32 %v919, %v920
        %v922 = vadd.f32 %v908, %v696
        %v923 = vadd.f32 %v921, %v696
        %v926 = vcombine.low %v922, %v923
        %v928 = vunpack.c.l.s4 1966171168
        %v929 = vunpack.c.0.s8 %v928
        %v930 = vlaneseq
        %v931 = vshrl.u32 %v930, 7
        %v932 = vsub.s32 %v929, %v931
        %v933 = vrot.slane %v926, %v932
        %v935 = vunpack.c.l.s4 1966171168
        %v936 = vunpack.c.0.s8 %v935
        %v937 = vlaneseq
        %v938 = vshrl.u32 %v937, 7
        %v939 = vsub.s32 %v936, %v938
        %v940 = vrot.slane %v933, %v939
        %s942 = scalar_lea.vmem %s271, 2 [#allocation3]
        %943 = vst.msk [vmem:[%s942] sm:$0x3] %vm720, %v940
        %s944 = scalar_lea.vmem %s275, 4
        %v945 = vld [vmem:[%s944] sm:$0x3]
        %v947 = vlaneseq
        %v948 = vshrl.u32 %v947, 7
        %v949 = vsub.s32 0, %v948
        %v950 = vrot.slane %v945, %v949
        %v951 = vlaneseq
        %v952 = vshrl.u32 %v951, 7
        %v953 = vsub.s32 1, %v952
        %v954 = vrot.slane %v945, %v953
        %v957 = vmul.f32 %v328, %v950
        %v958 = vmul.f32 %v328, %v954
        %v959 = vmul.f32 %v333, %v950
        %v960 = vmul.f32 %v333, %v954
        %v961 = vmul.f32 %v338, %v950
        %v962 = vmul.f32 %v338, %v954
        %v963 = vmul.f32 %v343, %v950
        %v964 = vmul.f32 %v343, %v954
        %v965 = vmul.f32 %v348, %v950
        %v966 = vmul.f32 %v348, %v954
        %v967 = vmul.f32 %v353, %v950
        %v968 = vmul.f32 %v353, %v954
        %v969 = vmul.f32 %v358, %v950
        %v970 = vmul.f32 %v358, %v954
        %v971 = vmul.f32 %v363, %v950
        %v972 = vmul.f32 %v363, %v954
        %v973 = vadd.f32 %v957, %v395
        %v974 = vadd.f32 %v958, %v395
        %v975 = vadd.f32 %v959, %v400
        %v976 = vadd.f32 %v960, %v400
        %v977 = vadd.f32 %v961, %v405
        %v978 = vadd.f32 %v962, %v405
        %v979 = vadd.f32 %v963, %v410
        %v980 = vadd.f32 %v964, %v410
        %v981 = vadd.f32 %v965, %v415
        %v982 = vadd.f32 %v966, %v415
        %v983 = vadd.f32 %v967, %v420
        %v984 = vadd.f32 %v968, %v420
        %v985 = vadd.f32 %v969, %v425
        %v986 = vadd.f32 %v970, %v425
        %v987 = vadd.f32 %v971, %v430
        %v988 = vadd.f32 %v972, %v430
        %v989 = vmax.f32 %v973, 0.0
        %v990 = vmax.f32 %v974, 0.0
        %v991 = vmax.f32 %v975, 0.0
        %v992 = vmax.f32 %v976, 0.0
        %v993 = vmax.f32 %v977, 0.0
        %v994 = vmax.f32 %v978, 0.0
        %v995 = vmax.f32 %v979, 0.0
        %v996 = vmax.f32 %v980, 0.0
        %v997 = vmax.f32 %v981, 0.0
        %v998 = vmax.f32 %v982, 0.0
        %v999 = vmax.f32 %v983, 0.0
        %v1000 = vmax.f32 %v984, 0.0
        %v1001 = vmax.f32 %v985, 0.0
        %v1002 = vmax.f32 %v986, 0.0
        %v1003 = vmax.f32 %v987, 0.0
        %v1004 = vmax.f32 %v988, 0.0
        %v1005 = vpack.c.bf16 %v991, %v989
        %v1006 = vpack.c.bf16 %v992, %v990
        %v1007 = vpack.c.bf16 %v995, %v993
        %v1008 = vpack.c.bf16 %v996, %v994
        %v1009 = vpack.c.bf16 %v999, %v997
        %v1010 = vpack.c.bf16 %v1000, %v998
        %v1011 = vpack.c.bf16 %v1003, %v1001
        %v1012 = vpack.c.bf16 %v1004, %v1002
        %1013 = vmatprep.subr.bf16.mxu0 %v1006
        %1014 = vmatpush1.bf16.msra.mxu0 %v1005
        %1015 = vmatprep.subr.bf16.mxu0 %v1008
        %1016 = vmatpush1.bf16.msra.mxu0 %v1007
        %1017 = vmatprep.subr.bf16.mxu0 %v1010
        %1018 = vmatpush1.bf16.msra.mxu0 %v1009
        %1019 = vmatprep.subr.bf16.mxu0 %v1012
        %1020 = vmatpush1.bf16.msra.mxu0 %v1011
        %1021 = vmatprep.subr.bf16.mxu0 0
        %1022 = vmatpush1.bf16.msra.mxu0 0
        %1023 = vmatprep.subr.bf16.mxu0 0
        %1024 = vmatpush1.bf16.msra.mxu0 0
        %1025 = vmatprep.subr.bf16.mxu0 0
        %1026 = vmatpush1.bf16.msra.mxu0 0
        %1027 = vmatprep.subr.bf16.mxu0 0
        %1028 = vmatpush1.bf16.msra.mxu0 0
        %1029 = vmatprep.subr.bf16.mxu0 0
        %1030 = vmatpush1.bf16.msra.mxu0 0
        %1031 = vmatprep.subr.bf16.mxu0 0
        %1032 = vmatpush1.bf16.msra.mxu0 0
        %1033 = vmatprep.subr.bf16.mxu0 0
        %1034 = vmatpush1.bf16.msra.mxu0 0
        %1035 = vmatprep.subr.bf16.mxu0 0
        %1036 = vmatpush1.bf16.msra.mxu0 0
        %1037 = vmatprep.subr.bf16.mxu0 0
        %1038 = vmatpush1.bf16.msra.mxu0 0
        %1039 = vmatprep.subr.bf16.mxu0 0
        %1040 = vmatpush1.bf16.msra.mxu0 0
        %1041 = vmatprep.subr.bf16.mxu0 0
        %1042 = vmatpush1.bf16.msra.mxu0 0
        %1043 = vmatprep.subr.bf16.mxu0 0
        %1044 = vmatpush1.bf16.msra.mxu0 0
        %1045 = vmatprep.mubr.bf16.mxu0 0
        %1046 = vmatmul.mubr.bf16.gmra.mrb[0].mxu0 %v514
        %v1047 = vpop.f32.mrb[0].mxu0
        %v1048 = vadd.f32 %v475, %v1047
        %v1049 = vpop.f32.mrb[0].mxu0
        %v1050 = vadd.f32 %v475, %v1049
        %v1051 = vpop.f32.mrb[0].mxu0
        %v1052 = vadd.f32 %v480, %v1051
        %v1053 = vpop.f32.mrb[0].mxu0
        %v1054 = vadd.f32 %v480, %v1053
        %1055 = vmatprep.mubr.bf16.mxu0 0
        %1056 = vmatmul.mubr.bf16.gmra.mrb[0].mxu0 %v517
        %v1057 = vpop.f32.mrb[0].mxu0
        %v1058 = vadd.f32 %v485, %v1057
        %v1059 = vpop.f32.mrb[0].mxu0
        %v1060 = vadd.f32 %v485, %v1059
        %v1061 = vpop.f32.mrb[0].mxu0
        %v1062 = vadd.f32 %v490, %v1061
        %v1063 = vpop.f32.mrb[0].mxu0
        %v1064 = vadd.f32 %v490, %v1063
        %1065 = vmatprep.mubr.bf16.mxu0 0
        %1066 = vmatmul.mubr.bf16.gmra.mrb[0].mxu0 %v520
        %v1067 = vpop.f32.mrb[0].mxu0
        %v1068 = vadd.f32 %v495, %v1067
        %v1069 = vpop.f32.mrb[0].mxu0
        %v1070 = vadd.f32 %v495, %v1069
        %v1071 = vpop.f32.mrb[0].mxu0
        %v1072 = vadd.f32 %v500, %v1071
        %v1073 = vpop.f32.mrb[0].mxu0
        %v1074 = vadd.f32 %v500, %v1073
        %1075 = vmatprep.mubr.bf16.mxu0 0
        %1076 = vmatmul.mubr.bf16.gmra.mrb[0].mxu0 %v523
        %v1077 = vpop.f32.mrb[0].mxu0
        %v1078 = vadd.f32 %v505, %v1077
        %v1079 = vpop.f32.mrb[0].mxu0
        %v1080 = vadd.f32 %v505, %v1079
        %v1081 = vpop.f32.mrb[0].mxu0
        %v1082 = vadd.f32 %v510, %v1081
        %v1083 = vpop.f32.mrb[0].mxu0
        %v1084 = vadd.f32 %v510, %v1083
        %1085 = vdwg.mxu0
        %v1086 = vmax.f32 %v1048, 0.0
        %v1087 = vmax.f32 %v1050, 0.0
        %v1088 = vmax.f32 %v1052, 0.0
        %v1089 = vmax.f32 %v1054, 0.0
        %v1090 = vmax.f32 %v1058, 0.0
        %v1091 = vmax.f32 %v1060, 0.0
        %v1092 = vmax.f32 %v1062, 0.0
        %v1093 = vmax.f32 %v1064, 0.0
        %v1094 = vmax.f32 %v1068, 0.0
        %v1095 = vmax.f32 %v1070, 0.0
        %v1096 = vmax.f32 %v1072, 0.0
        %v1097 = vmax.f32 %v1074, 0.0
        %v1098 = vmax.f32 %v1078, 0.0
        %v1099 = vmax.f32 %v1080, 0.0
        %v1100 = vmax.f32 %v1082, 0.0
        %v1101 = vmax.f32 %v1084, 0.0
        %v1102 = vmul.f32 %v617, %v1086
        %v1103 = vmul.f32 %v617, %v1087
        %v1104 = vmul.f32 %v622, %v1088
        %v1105 = vmul.f32 %v622, %v1089
        %v1106 = vmul.f32 %v627, %v1090
        %v1107 = vmul.f32 %v627, %v1091
        %v1108 = vmul.f32 %v632, %v1092
        %v1109 = vmul.f32 %v632, %v1093
        %v1110 = vmul.f32 %v637, %v1094
        %v1111 = vmul.f32 %v637, %v1095
        %v1112 = vmul.f32 %v642, %v1096
        %v1113 = vmul.f32 %v642, %v1097
        %v1114 = vmul.f32 %v647, %v1098
        %v1115 = vmul.f32 %v647, %v1099
        %v1116 = vmul.f32 %v652, %v1100
        %v1117 = vmul.f32 %v652, %v1101
        %v1118 = vadd.f32 %v1102, %v1104
        %v1119 = vadd.f32 %v1118, %v1106
        %v1120 = vadd.f32 %v1119, %v1108
        %v1121 = vadd.f32 %v1120, %v1110
        %v1122 = vadd.f32 %v1121, %v1112
        %v1123 = vadd.f32 %v1122, %v1114
        %v1124 = vadd.f32 %v1123, %v1116
        %v1125 = vrot.slane %v1124, 4
        %v1126 = vadd.f32 %v1124, %v1125
        %v1127 = vrot.slane %v1126, 2
        %v1128 = vadd.f32 %v1126, %v1127
        %v1129 = vrot.slane %v1128, 1
        %v1130 = vadd.f32 %v1128, %v1129
        %v1131 = vadd.f32 %v1103, %v1105
        %v1132 = vadd.f32 %v1131, %v1107
        %v1133 = vadd.f32 %v1132, %v1109
        %v1134 = vadd.f32 %v1133, %v1111
        %v1135 = vadd.f32 %v1134, %v1113
        %v1136 = vadd.f32 %v1135, %v1115
        %v1137 = vadd.f32 %v1136, %v1117
        %v1138 = vrot.slane %v1137, 4
        %v1139 = vadd.f32 %v1137, %v1138
        %v1140 = vrot.slane %v1139, 2
        %v1141 = vadd.f32 %v1139, %v1140
        %v1142 = vrot.slane %v1141, 1
        %v1143 = vadd.f32 %v1141, %v1142
        %v1144 = vadd.f32 %v1130, %v696
        %v1145 = vadd.f32 %v1143, %v696
        %v1148 = vcombine.low %v1144, %v1145
        %v1150 = vunpack.c.l.s4 1966171168
        %v1151 = vunpack.c.0.s8 %v1150
        %v1152 = vlaneseq
        %v1153 = vshrl.u32 %v1152, 7
        %v1154 = vsub.s32 %v1151, %v1153
        %v1155 = vrot.slane %v1148, %v1154
        %v1157 = vunpack.c.l.s4 1966171168
        %v1158 = vunpack.c.0.s8 %v1157
        %v1159 = vlaneseq
        %v1160 = vshrl.u32 %v1159, 7
        %v1161 = vsub.s32 %v1158, %v1160
        %v1162 = vrot.slane %v1155, %v1161
        %s1164 = scalar_lea.vmem %s271, 4 [#allocation3]
        %1165 = vst.msk [vmem:[%s1164] sm:$0x3] %vm720, %v1162
        %s1166 = scalar_lea.vmem %s275, 6
        %v1167 = vld [vmem:[%s1166] sm:$0x3]
        %v1169 = vlaneseq
        %v1170 = vshrl.u32 %v1169, 7
        %v1171 = vsub.s32 0, %v1170
        %v1172 = vrot.slane %v1167, %v1171
        %v1173 = vlaneseq
        %v1174 = vshrl.u32 %v1173, 7
        %v1175 = vsub.s32 1, %v1174
        %v1176 = vrot.slane %v1167, %v1175
        %v1179 = vmul.f32 %v328, %v1172
        %v1180 = vmul.f32 %v328, %v1176
        %v1181 = vmul.f32 %v333, %v1172
        %v1182 = vmul.f32 %v333, %v1176
        %v1183 = vmul.f32 %v338, %v1172
        %v1184 = vmul.f32 %v338, %v1176
        %v1185 = vmul.f32 %v343, %v1172
        %v1186 = vmul.f32 %v343, %v1176
        %v1187 = vmul.f32 %v348, %v1172
        %v1188 = vmul.f32 %v348, %v1176
        %v1189 = vmul.f32 %v353, %v1172
        %v1190 = vmul.f32 %v353, %v1176
        %v1191 = vmul.f32 %v358, %v1172
        %v1192 = vmul.f32 %v358, %v1176
        %v1193 = vmul.f32 %v363, %v1172
        %v1194 = vmul.f32 %v363, %v1176
        %v1195 = vadd.f32 %v1179, %v395
        %v1196 = vadd.f32 %v1180, %v395
        %v1197 = vadd.f32 %v1181, %v400
        %v1198 = vadd.f32 %v1182, %v400
        %v1199 = vadd.f32 %v1183, %v405
        %v1200 = vadd.f32 %v1184, %v405
        %v1201 = vadd.f32 %v1185, %v410
        %v1202 = vadd.f32 %v1186, %v410
        %v1203 = vadd.f32 %v1187, %v415
        %v1204 = vadd.f32 %v1188, %v415
        %v1205 = vadd.f32 %v1189, %v420
        %v1206 = vadd.f32 %v1190, %v420
        %v1207 = vadd.f32 %v1191, %v425
        %v1208 = vadd.f32 %v1192, %v425
        %v1209 = vadd.f32 %v1193, %v430
        %v1210 = vadd.f32 %v1194, %v430
        %v1211 = vmax.f32 %v1195, 0.0
        %v1212 = vmax.f32 %v1196, 0.0
        %v1213 = vmax.f32 %v1197, 0.0
        %v1214 = vmax.f32 %v1198, 0.0
        %v1215 = vmax.f32 %v1199, 0.0
        %v1216 = vmax.f32 %v1200, 0.0
        %v1217 = vmax.f32 %v1201, 0.0
        %v1218 = vmax.f32 %v1202, 0.0
        %v1219 = vmax.f32 %v1203, 0.0
        %v1220 = vmax.f32 %v1204, 0.0
        %v1221 = vmax.f32 %v1205, 0.0
        %v1222 = vmax.f32 %v1206, 0.0
        %v1223 = vmax.f32 %v1207, 0.0
        %v1224 = vmax.f32 %v1208, 0.0
        %v1225 = vmax.f32 %v1209, 0.0
        %v1226 = vmax.f32 %v1210, 0.0
        %v1227 = vpack.c.bf16 %v1213, %v1211
        %v1228 = vpack.c.bf16 %v1214, %v1212
        %v1229 = vpack.c.bf16 %v1217, %v1215
        %v1230 = vpack.c.bf16 %v1218, %v1216
        %v1231 = vpack.c.bf16 %v1221, %v1219
        %v1232 = vpack.c.bf16 %v1222, %v1220
        %v1233 = vpack.c.bf16 %v1225, %v1223
        %v1234 = vpack.c.bf16 %v1226, %v1224
        %1235 = vmatprep.subr.bf16.mxu0 %v1228
        %1236 = vmatpush1.bf16.msra.mxu0 %v1227
        %1237 = vmatprep.subr.bf16.mxu0 %v1230
        %1238 = vmatpush1.bf16.msra.mxu0 %v1229
        %1239 = vmatprep.subr.bf16.mxu0 %v1232
        %1240 = vmatpush1.bf16.msra.mxu0 %v1231
        %1241 = vmatprep.subr.bf16.mxu0 %v1234
        %1242 = vmatpush1.bf16.msra.mxu0 %v1233
        %1243 = vmatprep.subr.bf16.mxu0 0
        %1244 = vmatpush1.bf16.msra.mxu0 0
        %1245 = vmatprep.subr.bf16.mxu0 0
        %1246 = vmatpush1.bf16.msra.mxu0 0
        %1247 = vmatprep.subr.bf16.mxu0 0
        %1248 = vmatpush1.bf16.msra.mxu0 0
        %1249 = vmatprep.subr.bf16.mxu0 0
        %1250 = vmatpush1.bf16.msra.mxu0 0
        %1251 = vmatprep.subr.bf16.mxu0 0
        %1252 = vmatpush1.bf16.msra.mxu0 0
        %1253 = vmatprep.subr.bf16.mxu0 0
        %1254 = vmatpush1.bf16.msra.mxu0 0
        %1255 = vmatprep.subr.bf16.mxu0 0
        %1256 = vmatpush1.bf16.msra.mxu0 0
        %1257 = vmatprep.subr.bf16.mxu0 0
        %1258 = vmatpush1.bf16.msra.mxu0 0
        %1259 = vmatprep.subr.bf16.mxu0 0
        %1260 = vmatpush1.bf16.msra.mxu0 0
        %1261 = vmatprep.subr.bf16.mxu0 0
        %1262 = vmatpush1.bf16.msra.mxu0 0
        %1263 = vmatprep.subr.bf16.mxu0 0
        %1264 = vmatpush1.bf16.msra.mxu0 0
        %1265 = vmatprep.subr.bf16.mxu0 0
        %1266 = vmatpush1.bf16.msra.mxu0 0
        %1267 = vmatprep.mubr.bf16.mxu0 0
        %1268 = vmatmul.mubr.bf16.gmra.mrb[0].mxu0 %v514
        %v1269 = vpop.f32.mrb[0].mxu0
        %v1270 = vadd.f32 %v475, %v1269
        %v1271 = vpop.f32.mrb[0].mxu0
        %v1272 = vadd.f32 %v475, %v1271
        %v1273 = vpop.f32.mrb[0].mxu0
        %v1274 = vadd.f32 %v480, %v1273
        %v1275 = vpop.f32.mrb[0].mxu0
        %v1276 = vadd.f32 %v480, %v1275
        %1277 = vmatprep.mubr.bf16.mxu0 0
        %1278 = vmatmul.mubr.bf16.gmra.mrb[0].mxu0 %v517
        %v1279 = vpop.f32.mrb[0].mxu0
        %v1280 = vadd.f32 %v485, %v1279
        %v1281 = vpop.f32.mrb[0].mxu0
        %v1282 = vadd.f32 %v485, %v1281
        %v1283 = vpop.f32.mrb[0].mxu0
        %v1284 = vadd.f32 %v490, %v1283
        %v1285 = vpop.f32.mrb[0].mxu0
        %v1286 = vadd.f32 %v490, %v1285
        %1287 = vmatprep.mubr.bf16.mxu0 0
        %1288 = vmatmul.mubr.bf16.gmra.mrb[0].mxu0 %v520
        %v1289 = vpop.f32.mrb[0].mxu0
        %v1290 = vadd.f32 %v495, %v1289
        %v1291 = vpop.f32.mrb[0].mxu0
        %v1292 = vadd.f32 %v495, %v1291
        %v1293 = vpop.f32.mrb[0].mxu0
        %v1294 = vadd.f32 %v500, %v1293
        %v1295 = vpop.f32.mrb[0].mxu0
        %v1296 = vadd.f32 %v500, %v1295
        %1297 = vmatprep.mubr.bf16.mxu0 0
        %1298 = vmatmul.mubr.bf16.gmra.mrb[0].mxu0 %v523
        %v1299 = vpop.f32.mrb[0].mxu0
        %v1300 = vadd.f32 %v505, %v1299
        %v1301 = vpop.f32.mrb[0].mxu0
        %v1302 = vadd.f32 %v505, %v1301
        %v1303 = vpop.f32.mrb[0].mxu0
        %v1304 = vadd.f32 %v510, %v1303
        %v1305 = vpop.f32.mrb[0].mxu0
        %v1306 = vadd.f32 %v510, %v1305
        %1307 = vdwg.mxu0
        %v1308 = vmax.f32 %v1270, 0.0
        %v1309 = vmax.f32 %v1272, 0.0
        %v1310 = vmax.f32 %v1274, 0.0
        %v1311 = vmax.f32 %v1276, 0.0
        %v1312 = vmax.f32 %v1280, 0.0
        %v1313 = vmax.f32 %v1282, 0.0
        %v1314 = vmax.f32 %v1284, 0.0
        %v1315 = vmax.f32 %v1286, 0.0
        %v1316 = vmax.f32 %v1290, 0.0
        %v1317 = vmax.f32 %v1292, 0.0
        %v1318 = vmax.f32 %v1294, 0.0
        %v1319 = vmax.f32 %v1296, 0.0
        %v1320 = vmax.f32 %v1300, 0.0
        %v1321 = vmax.f32 %v1302, 0.0
        %v1322 = vmax.f32 %v1304, 0.0
        %v1323 = vmax.f32 %v1306, 0.0
        %v1324 = vmul.f32 %v617, %v1308
        %v1325 = vmul.f32 %v617, %v1309
        %v1326 = vmul.f32 %v622, %v1310
        %v1327 = vmul.f32 %v622, %v1311
        %v1328 = vmul.f32 %v627, %v1312
        %v1329 = vmul.f32 %v627, %v1313
        %v1330 = vmul.f32 %v632, %v1314
        %v1331 = vmul.f32 %v632, %v1315
        %v1332 = vmul.f32 %v637, %v1316
        %v1333 = vmul.f32 %v637, %v1317
        %v1334 = vmul.f32 %v642, %v1318
        %v1335 = vmul.f32 %v642, %v1319
        %v1336 = vmul.f32 %v647, %v1320
        %v1337 = vmul.f32 %v647, %v1321
        %v1338 = vmul.f32 %v652, %v1322
        %v1339 = vmul.f32 %v652, %v1323
        %v1340 = vadd.f32 %v1324, %v1326
        %v1341 = vadd.f32 %v1340, %v1328
        %v1342 = vadd.f32 %v1341, %v1330
        %v1343 = vadd.f32 %v1342, %v1332
        %v1344 = vadd.f32 %v1343, %v1334
        %v1345 = vadd.f32 %v1344, %v1336
        %v1346 = vadd.f32 %v1345, %v1338
        %v1347 = vrot.slane %v1346, 4
        %v1348 = vadd.f32 %v1346, %v1347
        %v1349 = vrot.slane %v1348, 2
        %v1350 = vadd.f32 %v1348, %v1349
        %v1351 = vrot.slane %v1350, 1
        %v1352 = vadd.f32 %v1350, %v1351
        %v1353 = vadd.f32 %v1325, %v1327
        %v1354 = vadd.f32 %v1353, %v1329
        %v1355 = vadd.f32 %v1354, %v1331
        %v1356 = vadd.f32 %v1355, %v1333
        %v1357 = vadd.f32 %v1356, %v1335
        %v1358 = vadd.f32 %v1357, %v1337
        %v1359 = vadd.f32 %v1358, %v1339
        %v1360 = vrot.slane %v1359, 4
        %v1361 = vadd.f32 %v1359, %v1360
        %v1362 = vrot.slane %v1361, 2
        %v1363 = vadd.f32 %v1361, %v1362
        %v1364 = vrot.slane %v1363, 1
        %v1365 = vadd.f32 %v1363, %v1364
        %v1366 = vadd.f32 %v1352, %v696
        %v1367 = vadd.f32 %v1365, %v696
        %v1370 = vcombine.low %v1366, %v1367
        %v1372 = vunpack.c.l.s4 1966171168
        %v1373 = vunpack.c.0.s8 %v1372
        %v1374 = vlaneseq
        %v1375 = vshrl.u32 %v1374, 7
        %v1376 = vsub.s32 %v1373, %v1375
        %v1377 = vrot.slane %v1370, %v1376
        %v1379 = vunpack.c.l.s4 1966171168
        %v1380 = vunpack.c.0.s8 %v1379
        %v1381 = vlaneseq
        %v1382 = vshrl.u32 %v1381, 7
        %v1383 = vsub.s32 %v1380, %v1382
        %v1384 = vrot.slane %v1377, %v1383
        %s1386 = scalar_lea.vmem %s271, 6 [#allocation3]
        %1387 = vst.msk [vmem:[%s1386] sm:$0x3] %vm720, %v1384
        %s1388 = sand.u32 %s182, 1
        %s1389 = scalar_lea.sflag [#allocation4], %s1388
        %s1390 = sand.u32 %s182, 1
        %s1391 = smul.addr %s1390, 8
        %s1392 = scalar_lea.vmem [#allocation3], %s1391
        // Predicated region
        $region49: #{tpu_custom_call.1} parent=47 // pred_check
          %p1393 = pneg %p192
        $region50: #{tpu_custom_call.1} parent=47 // pred_check_branch
          %1395 = sbr.rel (%p1393) target = $region52
        $region51: #{tpu_custom_call.1} parent=47 // pred_region
          %s1396 = smul.u32 8, %s22
          %s1398 = ssub.s32 128, 128
          %1399 = vsyncadd %s1389, %s1398
          %s1400 = smul.addr %s1396, 16
          %s1401 = scalar_lea.hbm %s7, %s1400
          %s1403 = sshll.u32 %s1392, 4
          %s1404 = int_to_ptr.vmem [resolvable:$true] %s1403
          %1406 = dma.vmem_to_hbm [thread:$0]  %s1404, 128, %s1401, %s1389
        $region52: #{tpu_custom_call.1} parent=47 // pred_fallthru
          _
      $region48: #{tpu_custom_call.1} parent=5 // pred_fallthru
        _
      %p1407 = scmp.le.s32.totalorder 2, %s17
      // Predicated region
      $region53: #{tpu_custom_call.1} parent=5 // pred_check
        %p1408 = pneg %p1407
      $region54: #{tpu_custom_call.1} parent=5 // pred_check_branch
        %1410 = sbr.rel (%p1408) target = $region56
      $region55: #{tpu_custom_call.1} parent=5 // pred_region
        %s1411 = ssub.s32 %s17, 2
        // Predicated region
        $region57: #{tpu_custom_call.1} parent=55 // pred_check
          %p1412 = pneg %p198
        $region58: #{tpu_custom_call.1} parent=55 // pred_check_branch
          %1414 = sbr.rel (%p1412) target = $region60
        $region59: #{tpu_custom_call.1} parent=55 // pred_region
          %s1415 = sand.u32 %s183, 1
          %s1416 = scalar_lea.sflag [#allocation4], %s1415
          %s1417 = sand.u32 %s183, 1
          %s1418 = smul.addr %s1417, 8
          %s1419 = scalar_lea.vmem [#allocation3], %s1418
          %1420 = dma.done %s1416, 128
        $region60: #{tpu_custom_call.1} parent=55 // pred_fallthru
          _
      $region56: #{tpu_custom_call.1} parent=5 // pred_fallthru
        _
    $region6: #{tpu_custom_call.1} parent=1 // loop_footer
      %s21 = sadd.s32 1, %s17
    $region7: #{tpu_custom_call.1} parent=1 // loop_footer_branch
      %16 = sbr.rel target = $region3
    $region8: #{tpu_custom_call.1} parent=1 // loop_exit
      _
    %1421 = vsyncpa [#allocation4], 1
    %s1422 = scalar_lea.sflag [#allocation4], 1
    %1423 = vsyncpa %s1422, 1

</llo_original>
